<compile_context>
chip_gen: v5e
topology: v5e:2x2
jax: 0.10.0
libtpu: 0.0.40
codegen_flags: <defaults>
</compile_context>

<pallas_src>
import functools

import jax
import jax.numpy as jnp
from jax.experimental import pallas as pl
from jax.experimental.pallas import tpu as pltpu

EPS = 1e-5
LANE = 128
DEFAULT_TILE_N = 1024


def _round_up(x, m):
    return (x + m - 1) // m * m


def _pad2(a, rows, cols):
    out = jnp.zeros((rows, cols), a.dtype)
    return out.at[: a.shape[0], : a.shape[1]].set(a)


# --------------------------------------------------------------------------------------
# Kernel helpers
# --------------------------------------------------------------------------------------
def _write_moments(h, pstat_ref, n_valid, mask_last):
    """Write this tile's (sum, sumsq) over valid batch rows into its own output block."""
    def moments(hm):
        return jnp.concatenate(
            [jnp.sum(hm, axis=0, keepdims=True),
             jnp.sum(hm * hm, axis=0, keepdims=True)], axis=0)

    if not mask_last:                                  # all rows of every tile are valid
        pstat_ref[0] = moments(h)
    else:
        i = pl.program_id(0)
        is_last = i == pl.num_programs(0) - 1

        @pl.when(jnp.logical_not(is_last))
        def _():
            pstat_ref[0] = moments(h)

        @pl.when(is_last)                              # ragged tile: mask OOB garbage rows
        def _():
            row = i * h.shape[0] + jax.lax.broadcasted_iota(jnp.int32, h.shape, 0)
            pstat_ref[0] = moments(jnp.where(row < n_valid, h, 0.0))


# --------------------------------------------------------------------------------------
# Kernels (each grid step is independent -> "parallel" on every axis)
# --------------------------------------------------------------------------------------
def _enc_stats_kernel(x_ref, we1_ref, be1_ref, pstat_ref, *, n_valid, mask_last):
    """Pass A: h1 = x@We1 + b; emit per-tile partial (sum, sumsq) of h1."""
    h = jnp.dot(x_ref[...], we1_ref[...], preferred_element_type=jnp.float32) + be1_ref[...]
    _write_moments(h, pstat_ref, n_valid, mask_last)


def _encode_kernel(x_ref, esc_ref, we1_ref, be1_ref, we2_ref, be2_ref,
                   wd1_ref, bd1_ref, lat_ref, dstat_ref, *, n_valid, mask_last):
    """Pass B: encoder with enc-BN folded to (scale, shift) -> latent tile; also emit
    per-tile partial (sum, sumsq) of the decoder hidden layer."""
    h = jnp.dot(x_ref[...], we1_ref[...], preferred_element_type=jnp.float32) + be1_ref[...]
    h = jnp.maximum(h * esc_ref[0:1, :] + esc_ref[1:2, :], 0.0)           # BN + ReLU
    lat = jnp.dot(h.astype(we2_ref.dtype), we2_ref[...],
                  preferred_element_type=jnp.float32) + be2_ref[...]
    lat_q = lat.astype(lat_ref.dtype)
    lat_ref[...] = lat_q

    d = jnp.dot(lat_q.astype(wd1_ref.dtype), wd1_ref[...],
                preferred_element_type=jnp.float32) + bd1_ref[...]
    _write_moments(d, dstat_ref, n_valid, mask_last)


def _decode_kernel(lat_ref, dsc_ref, wd1_ref, bd1_ref, wd2_ref, bd2_ref, xhat_ref):
    """Pass C: decoder with dec-BN folded to (scale, shift)."""
    d = jnp.dot(lat_ref[...], wd1_ref[...], preferred_element_type=jnp.float32) + bd1_ref[...]
    d = jnp.maximum(d * dsc_ref[0:1, :] + dsc_ref[1:2, :], 0.0)           # BN + ReLU
    xh = jnp.dot(d.astype(wd2_ref.dtype), wd2_ref[...],
                 preferred_element_type=jnp.float32) + bd2_ref[...]
    xhat_ref[...] = xh.astype(xhat_ref.dtype)


# --------------------------------------------------------------------------------------
# Wrapper
# --------------------------------------------------------------------------------------
def _fold_bn(pstats, gamma, beta, n):
    """Reduce per-tile (sum, sumsq) partials and fold gamma/beta into affine scale/shift.
    Padded lanes keep gamma=beta=0 -> scale=shift=0 -> padded lanes stay exactly 0."""
    s = jnp.sum(pstats, axis=0)                                   # (2, Dp) f32
    mean = s[0:1, :] / n
    var = jnp.maximum(s[1:2, :] / n - mean * mean, 0.0)           # biased var (PyTorch BN)
    scale = gamma * jax.lax.rsqrt(var + EPS)
    shift = beta - mean * scale
    return jnp.concatenate([scale, shift], axis=0)                # (2, Dp)


def autoencoder_forward(x, params, *, tile_n=DEFAULT_TILE_N, compute_dtype=jnp.bfloat16):
    """x: [N, D0]. params: dict from init_params (unpadded, f32). Returns (x_hat, latent)."""
    N, D0 = x.shape
    D1 = params["we1"].shape[1]
    D2 = params["we2"].shape[1]
    out_dtype = x.dtype
    cdt = compute_dtype
    bpe = jnp.dtype(cdt).itemsize
    obe = jnp.dtype(out_dtype).itemsize

    D0p, D1p, D2p = (_round_up(d, LANE) for d in (D0, D1, D2))
    tile_n = max(8, min(_round_up(tile_n, 8), _round_up(N, 8)))
    nt = pl.cdiv(N, tile_n)
    mask_last = (N % tile_n) != 0

    # ---- layout plumbing: x stays unpadded; only output/lane dims are padded to 128 ----
    xc = x.astype(cdt)
    we1 = _pad2(params["we1"], D0, D1p).astype(cdt)    # contraction dim left unpadded
    we2 = _pad2(params["we2"], D1p, D2p).astype(cdt)
    wd1 = _pad2(params["wd1"], D2p, D1p).astype(cdt)
    wd2 = _pad2(params["wd2"], D1p, D0p).astype(cdt)
    be1 = _pad2(params["be1"], 1, D1p)
    be2 = _pad2(params["be2"], 1, D2p)
    bd1 = _pad2(params["bd1"], 1, D1p)
    bd2 = _pad2(params["bd2"], 1, D0p)
    ge1 = _pad2(params["ge1"], 1, D1p)                 # gamma/beta pads are 0
    ae1 = _pad2(params["ae1"], 1, D1p)
    gd1 = _pad2(params["gd1"], 1, D1p)
    ad1 = _pad2(params["ad1"], 1, D1p)

    # ---- VMEM budget: double-buffered streamed tiles + double-buffered constants ----
    stream = 2 * tile_n * (D0 * bpe + D2p * bpe + D0p * obe) + 2 * (2 * D1p * 4)
    weights = 2 * bpe * (D0 * D1p + D1p * D2p + D2p * D1p + D1p * D0p)
    vecs = 64 * max(D0p, D1p, D2p) * 4
    vmem_limit = int(min(48 << 20, max(16 << 20, 2 * (stream + weights + vecs))))

    cparams = pltpu.CompilerParams(dimension_semantics=("parallel",),
                                   vmem_limit_bytes=vmem_limit)

    def row_tile(d):
        return pl.BlockSpec((tile_n, d), lambda i: (i, 0))

    def const2(r, c):
        return pl.BlockSpec((r, c), lambda i: (0, 0))

    pstat_spec = pl.BlockSpec((1, 2, D1p), lambda i: (i, 0, 0))

    # ---- pass A: encoder-hidden partial statistics (fully parallel over batch tiles) ----
    enc_pstats = pl.pallas_call(
        functools.partial(_enc_stats_kernel, n_valid=N, mask_last=mask_last),
        out_shape=jax.ShapeDtypeStruct((nt, 2, D1p), jnp.float32),
        grid=(nt,),
        in_specs=[row_tile(D0), const2(D0, D1p), const2(1, D1p)],
        out_specs=pstat_spec,
        compiler_params=cparams,
        cost_estimate=pl.CostEstimate(
            flops=2 * N * D0 * D1p, transcendentals=0,
            bytes_accessed=N * D0 * bpe + D0 * D1p * bpe + (nt * 2 + 1) * D1p * 4),
    )(xc, we1, be1)
    enc_ss = _fold_bn(enc_pstats, ge1, ae1, N)                    # (2, D1p) scale/shift

    # ---- pass B: encoder -> latent, plus decoder-hidden partial statistics ----
    lat_pad, dec_pstats = pl.pallas_call(
        functools.partial(_encode_kernel, n_valid=N, mask_last=mask_last),
        out_shape=(jax.ShapeDtypeStruct((N, D2p), cdt),
                   jax.ShapeDtypeStruct((nt, 2, D1p), jnp.float32)),
        grid=(nt,),
        in_specs=[row_tile(D0), const2(2, D1p),
                  const2(D0, D1p), const2(1, D1p),
                  const2(D1p, D2p), const2(1, D2p),
                  const2(D2p, D1p), const2(1, D1p)],
        out_specs=(row_tile(D2p), pstat_spec),
        compiler_params=cparams,
        cost_estimate=pl.CostEstimate(
            flops=2 * N * (D0 * D1p + D1p * D2p + D2p * D1p), transcendentals=0,
            bytes_accessed=N * (D0 + D2p) * bpe
            + (D0 * D1p + D1p * D2p + D2p * D1p) * bpe + (nt * 2 + 6) * D1p * 4),
    )(xc, enc_ss, we1, be1, we2, be2, wd1, bd1)
    dec_ss = _fold_bn(dec_pstats, gd1, ad1, N)                    # (2, D1p) scale/shift

    # ---- pass C: decoder -> x_hat (lane-dense padded writes, fully parallel) ----
    xhat_pad = pl.pallas_call(
        _decode_kernel,
        out_shape=jax.ShapeDtypeStruct((N, D0p), out_dtype),
        grid=(nt,),
        in_specs=[row_tile(D2p), const2(2, D1p),
                  const2(D2p, D1p), const2(1, D1p),
                  const2(D1p, D0p), const2(1, D0p)],
        out_specs=row_tile(D0p),
        compiler_params=cparams,
        cost_estimate=pl.CostEstimate(
            flops=2 * N * (D2p * D1p + D1p * D0p), transcendentals=0,
            bytes_accessed=N * D2p * bpe + N * D0p * obe
            + (D2p * D1p + D1p * D0p) * bpe + 6 * D1p * 4),
    )(lat_pad, dec_ss, wd1, bd1, wd2, bd2)

    return xhat_pad[:, :D0], lat_pad[:, :D2].astype(out_dtype)


# --------------------------------------------------------------------------------------
# Parameters & reference
# --------------------------------------------------------------------------------------
def init_params(key, encoder_structure):
    """Synthetic parameters mirroring torch.nn.Linear / BatchNorm1d defaults.
    Weights stored pre-transposed as [in_dim, out_dim]; biases / BN params as [1, dim]."""
    assert len(encoder_structure) == 3, "this kernel instantiates depth == 2"
    D0, D1, D2 = encoder_structure
    keys = jax.random.split(key, 4)

    def lin(k, din, dout):
        bound = 1.0 / jnp.sqrt(din)
        kw, kb = jax.random.split(k)
        w = jax.random.uniform(kw, (din, dout), jnp.float32, -bound, bound)
        b = jax.random.uniform(kb, (1, dout), jnp.float32, -bound, bound)
        return w, b

    we1, be1 = lin(keys[0], D0, D1)
    we2, be2 = lin(keys[1], D1, D2)
    wd1, bd1 = lin(keys[2], D2, D1)
    wd2, bd2 = lin(keys[3], D1, D0)
    ge1 = jnp.ones((1, D1), jnp.float32)   # BatchNorm1d default: gamma=1, beta=0
    ae1 = jnp.zeros((1, D1), jnp.float32)
    gd1 = jnp.ones((1, D1), jnp.float32)
    ad1 = jnp.zeros((1, D1), jnp.float32)
    return dict(we1=we1, be1=be1, ge1=ge1, ae1=ae1, we2=we2, be2=be2,
                wd1=wd1, bd1=bd1, gd1=gd1, ad1=ad1, wd2=wd2, bd2=bd2)


def reference_forward(x, p):
    """Pure-JAX reference (PyTorch semantics: training-mode BN, biased variance)."""
    def bn_relu(h, g, a):
        m = h.mean(0, keepdims=True)
        v = ((h - m) ** 2).mean(0, keepdims=True)
        return jnp.maximum((h - m) / jnp.sqrt(v + EPS) * g + a, 0.0)

    h = x @ p["we1"] + p["be1"]
    h = bn_relu(h, p["ge1"], p["ae1"])
    lat = h @ p["we2"] + p["be2"]
    d = lat @ p["wd1"] + p["bd1"]
    d = bn_relu(d, p["gd1"], p["ad1"])
    x_hat = d @ p["wd2"] + p["bd2"]
    return x_hat, lat


if __name__ == "__main__":
    key = jax.random.PRNGKey(0)
    k_x, k_p = jax.random.split(key)

    encoder_structure = [32, 16, 8]   # feature_dim=32, hidden=16, latent=8
    N = 12                            # not a multiple of 8 -> exercises ragged last tile

    x = jax.random.normal(k_x, (N, encoder_structure[0]), jnp.float32)
    params = init_params(k_p, encoder_structure)
    x_hat_ref, latent_ref = reference_forward(x, params)

    # tile_n=8 forces a multi-tile grid at this tiny batch so the per-tile partial-stats
    # + wrapper-reduce path is exercised; production uses the default 1024-row tiles.
    # 1) f32 compute path: tight check against the PyTorch-semantics reference.
    fwd_f32 = jax.jit(functools.partial(autoencoder_forward, tile_n=8,
                                        compute_dtype=jnp.float32))
    x_hat32, latent32 = fwd_f32(x, params)
    jax.block_until_ready((x_hat32, latent32))
    assert x_hat32.shape == (N, encoder_structure[0])
    assert latent32.shape == (N, encoder_structure[-1])
    assert jnp.allclose(latent32, latent_ref, atol=1e-3, rtol=1e-3), \
        float(jnp.max(jnp.abs(latent32 - latent_ref)))
    assert jnp.allclose(x_hat32, x_hat_ref, atol=1e-3, rtol=1e-3), \
        float(jnp.max(jnp.abs(x_hat32 - x_hat_ref)))

    # 2) bf16 compute path (production config per perf review): loose sanity check.
    fwd_bf16 = jax.jit(functools.partial(autoencoder_forward, tile_n=8,
                                         compute_dtype=jnp.bfloat16))
    x_hat, latent = fwd_bf16(x, params)
    jax.block_until_ready((x_hat, latent))
    assert x_hat.shape == (N, encoder_structure[0])
    assert latent.shape == (N, encoder_structure[-1])
    assert jnp.allclose(latent, latent_ref, atol=2e-1, rtol=2e-1), \
        float(jnp.max(jnp.abs(latent - latent_ref)))
    assert jnp.allclose(x_hat, x_hat_ref, atol=2e-1, rtol=2e-1), \
        float(jnp.max(jnp.abs(x_hat - x_hat_ref)))

    print("KERNEL_OK")
</pallas_src>

<mosaic_0001>
module attributes {stable_mosaic.version = 11 : i64} {
  func.func @_enc_stats_kernel(%arg0: i32, %arg1: memref<8x32xf32, #tpu.memory_space<vmem>>, %arg2: memref<32x128xf32, #tpu.memory_space<vmem>>, %arg3: memref<1x128xf32, #tpu.memory_space<vmem>>, %arg4: memref<1x2x128xf32, #tpu.memory_space<vmem>>) attributes {dimension_semantics = [#tpu.dimension_semantics<parallel>], iteration_bounds = array<i64: 2>, scalar_prefetch = 0 : i64, scratch_operands = 0 : i64, tpu.core_type = #tpu.core_type<tc>, window_params = [{transform_indices = @transform_0, window_bounds = array<i64: 8, 32>}, {pipeline_mode = #tpu.pipeline_mode<synchronous>, transform_indices = @transform_1, window_bounds = array<i64: 32, 128>}, {pipeline_mode = #tpu.pipeline_mode<synchronous>, transform_indices = @transform_2, window_bounds = array<i64: 1, 128>}, {transform_indices = @transform_3, window_bounds = array<i64: 1, 2, 128>}]} {
    %c0 = arith.constant 0 : index
    %c0_0 = arith.constant 0 : index
    %0 = vector.load %arg1[%c0, %c0_0] : memref<8x32xf32, #tpu.memory_space<vmem>>, vector<8x32xf32>
    %c0_1 = arith.constant 0 : index
    %c0_2 = arith.constant 0 : index
    %1 = vector.load %arg2[%c0_1, %c0_2] : memref<32x128xf32, #tpu.memory_space<vmem>>, vector<32x128xf32>
    %cst = arith.constant dense<0.000000e+00> : vector<8x128xf32>
    %2 = tpu.matmul %0, %1, %cst {dimension_numbers = #tpu.dot_dimension_numbers<[1], [0], [0], [1], [0, 0, 1, 1], [], []>} : vector<8x32xf32>, vector<32x128xf32>, vector<8x128xf32> -> vector<8x128xf32>
    %c0_3 = arith.constant 0 : index
    %c0_4 = arith.constant 0 : index
    %3 = vector.load %arg3[%c0_3, %c0_4] : memref<1x128xf32, #tpu.memory_space<vmem>>, vector<1x128xf32>
    %4 = vector.broadcast %3 : vector<1x128xf32> to vector<8x128xf32>
    %5 = arith.addf %2, %4 : vector<8x128xf32>
    %c1_i32 = arith.constant 1 : i32
    %6 = arith.cmpi eq, %arg0, %c1_i32 : i32
    %true = arith.constant true
    %7 = arith.xori %6, %true : i1
    %8 = arith.extui %7 : i1 to i32
    %c0_i32 = arith.constant 0 : i32
    %9 = arith.cmpi ne, %8, %c0_i32 : i32
    scf.if %9 {
      %cst_6 = arith.constant dense<0.000000e+00> : vector<128xf32>
      %12 = vector.multi_reduction <add>, %5, %cst_6 [0] : vector<8x128xf32> to vector<128xf32>
      %13 = vector.shape_cast %12 : vector<128xf32> to vector<1x128xf32>
      %14 = arith.mulf %5, %5 : vector<8x128xf32>
      %cst_7 = arith.constant dense<0.000000e+00> : vector<128xf32>
      %15 = vector.multi_reduction <add>, %14, %cst_7 [0] : vector<8x128xf32> to vector<128xf32>
      %16 = vector.shape_cast %15 : vector<128xf32> to vector<1x128xf32>
      %17 = tpu.concatenate %13, %16 in 0 : vector<1x128xf32>, vector<1x128xf32> -> vector<2x128xf32>
      %c0_8 = arith.constant 0 : index
      %c0_9 = arith.constant 0 : index
      %c0_10 = arith.constant 0 : index
      %18 = vector.load %arg4[%c0_8, %c0_9, %c0_10] : memref<1x2x128xf32, #tpu.memory_space<vmem>>, vector<1x2x128xf32>
      %19 = vector.shape_cast %18 : vector<1x2x128xf32> to vector<2x128xf32>
      %20 = vector.shape_cast %17 : vector<2x128xf32> to vector<1x2x128xf32>
      tpu.vector_store %arg4[%c0_8, %c0_9, %c0_10], %20 {strides = array<i32>} : memref<1x2x128xf32, #tpu.memory_space<vmem>>, vector<1x2x128xf32>,
    } else {
    }
    %10 = arith.extui %6 : i1 to i32
    %c0_i32_5 = arith.constant 0 : i32
    %11 = arith.cmpi ne, %10, %c0_i32_5 : i32
    scf.if %11 {
      %c8_i32 = arith.constant 8 : i32
      %12 = arith.muli %arg0, %c8_i32 : i32
      %13 = tpu.iota {dimensions = array<i32: 0>} : vector<8x128xi32>
      %14 = vector.broadcast %12 : i32 to vector<8x128xi32>
      %15 = arith.addi %14, %13 : vector<8x128xi32>
      %c12_i32 = arith.constant 12 : i32
      %16 = vector.broadcast %c12_i32 : i32 to vector<8x128xi32>
      %17 = arith.cmpi slt, %15, %16 : vector<8x128xi32>
      %cst_6 = arith.constant 0.000000e+00 : f32
      %18 = vector.broadcast %cst_6 : f32 to vector<8x128xf32>
      %19 = arith.select %17, %5, %18 : vector<8x128xi1>, vector<8x128xf32>
      %cst_7 = arith.constant dense<0.000000e+00> : vector<128xf32>
      %20 = vector.multi_reduction <add>, %19, %cst_7 [0] : vector<8x128xf32> to vector<128xf32>
      %21 = vector.shape_cast %20 : vector<128xf32> to vector<1x128xf32>
      %22 = arith.mulf %19, %19 : vector<8x128xf32>
      %cst_8 = arith.constant dense<0.000000e+00> : vector<128xf32>
      %23 = vector.multi_reduction <add>, %22, %cst_8 [0] : vector<8x128xf32> to vector<128xf32>
      %24 = vector.shape_cast %23 : vector<128xf32> to vector<1x128xf32>
      %25 = tpu.concatenate %21, %24 in 0 : vector<1x128xf32>, vector<1x128xf32> -> vector<2x128xf32>
      %c0_9 = arith.constant 0 : index
      %c0_10 = arith.constant 0 : index
      %c0_11 = arith.constant 0 : index
      %26 = vector.load %arg4[%c0_9, %c0_10, %c0_11] : memref<1x2x128xf32, #tpu.memory_space<vmem>>, vector<1x2x128xf32>
      %27 = vector.shape_cast %26 : vector<1x2x128xf32> to vector<2x128xf32>
      %28 = vector.shape_cast %25 : vector<2x128xf32> to vector<1x2x128xf32>
      tpu.vector_store %arg4[%c0_9, %c0_10, %c0_11], %28 {strides = array<i32>} : memref<1x2x128xf32, #tpu.memory_space<vmem>>, vector<1x2x128xf32>,
    } else {
    }
    return
  }
  func.func @transform_0(%arg0: i32) -> (i32, i32) {
    %c0_i32 = arith.constant 0 : i32
    %c0_i32_0 = arith.constant 0 : i32
    return %arg0, %c0_i32 : i32, i32
  }
  func.func @transform_1(%arg0: i32) -> (i32, i32) {
    %c0_i32 = arith.constant 0 : i32
    %c0_i32_0 = arith.constant 0 : i32
    %c0_i32_1 = arith.constant 0 : i32
    return %c0_i32, %c0_i32_0 : i32, i32
  }
  func.func @transform_2(%arg0: i32) -> (i32, i32) {
    %c0_i32 = arith.constant 0 : i32
    %c0_i32_0 = arith.constant 0 : i32
    %c0_i32_1 = arith.constant 0 : i32
    return %c0_i32, %c0_i32_0 : i32, i32
  }
  func.func @transform_3(%arg0: i32) -> (i32, i32, i32) {
    %c0_i32 = arith.constant 0 : i32
    %c0_i32_0 = arith.constant 0 : i32
    %c0_i32_1 = arith.constant 0 : i32
    return %arg0, %c0_i32, %c0_i32_0 : i32, i32, i32
  }
}

module attributes {stable_mosaic.version = 11 : i64} {
  func.func @_encode_kernel(%arg0: i32, %arg1: memref<8x32xf32, #tpu.memory_space<vmem>>, %arg2: memref<2x128xf32, #tpu.memory_space<vmem>>, %arg3: memref<32x128xf32, #tpu.memory_space<vmem>>, %arg4: memref<1x128xf32, #tpu.memory_space<vmem>>, %arg5: memref<128x128xf32, #tpu.memory_space<vmem>>, %arg6: memref<1x128xf32, #tpu.memory_space<vmem>>, %arg7: memref<128x128xf32, #tpu.memory_space<vmem>>, %arg8: memref<1x128xf32, #tpu.memory_space<vmem>>, %arg9: memref<8x128xf32, #tpu.memory_space<vmem>>, %arg10: memref<1x2x128xf32, #tpu.memory_space<vmem>>) attributes {dimension_semantics = [#tpu.dimension_semantics<parallel>], iteration_bounds = array<i64: 2>, scalar_prefetch = 0 : i64, scratch_operands = 0 : i64, tpu.core_type = #tpu.core_type<tc>, window_params = [{transform_indices = @transform_0, window_bounds = array<i64: 8, 32>}, {pipeline_mode = #tpu.pipeline_mode<synchronous>, transform_indices = @transform_1, window_bounds = array<i64: 2, 128>}, {pipeline_mode = #tpu.pipeline_mode<synchronous>, transform_indices = @transform_2, window_bounds = array<i64: 32, 128>}, {pipeline_mode = #tpu.pipeline_mode<synchronous>, transform_indices = @transform_3, window_bounds = array<i64: 1, 128>}, {pipeline_mode = #tpu.pipeline_mode<synchronous>, transform_indices = @transform_4, window_bounds = array<i64: 128, 128>}, {pipeline_mode = #tpu.pipeline_mode<synchronous>, transform_indices = @transform_5, window_bounds = array<i64: 1, 128>}, {pipeline_mode = #tpu.pipeline_mode<synchronous>, transform_indices = @transform_6, window_bounds = array<i64: 128, 128>}, {pipeline_mode = #tpu.pipeline_mode<synchronous>, transform_indices = @transform_7, window_bounds = array<i64: 1, 128>}, {transform_indices = @transform_8, window_bounds = array<i64: 8, 128>}, {transform_indices = @transform_9, window_bounds = array<i64: 1, 2, 128>}]} {
    %c0 = arith.constant 0 : index
    %c0_0 = arith.constant 0 : index
    %0 = vector.load %arg1[%c0, %c0_0] : memref<8x32xf32, #tpu.memory_space<vmem>>, vector<8x32xf32>
    %c0_1 = arith.constant 0 : index
    %c0_2 = arith.constant 0 : index
    %1 = vector.load %arg3[%c0_1, %c0_2] : memref<32x128xf32, #tpu.memory_space<vmem>>, vector<32x128xf32>
    %cst = arith.constant dense<0.000000e+00> : vector<8x128xf32>
    %2 = tpu.matmul %0, %1, %cst {dimension_numbers = #tpu.dot_dimension_numbers<[1], [0], [0], [1], [0, 0, 1, 1], [], []>} : vector<8x32xf32>, vector<32x128xf32>, vector<8x128xf32> -> vector<8x128xf32>
    %c0_3 = arith.constant 0 : index
    %c0_4 = arith.constant 0 : index
    %3 = vector.load %arg4[%c0_3, %c0_4] : memref<1x128xf32, #tpu.memory_space<vmem>>, vector<1x128xf32>
    %4 = vector.broadcast %3 : vector<1x128xf32> to vector<8x128xf32>
    %5 = arith.addf %2, %4 : vector<8x128xf32>
    %c0_5 = arith.constant 0 : index
    %c0_6 = arith.constant 0 : index
    %6 = vector.load %arg2[%c0_5, %c0_6] : memref<2x128xf32, #tpu.memory_space<vmem>>, vector<1x128xf32>
    %7 = vector.broadcast %6 : vector<1x128xf32> to vector<8x128xf32>
    %8 = arith.mulf %5, %7 : vector<8x128xf32>
    %c1 = arith.constant 1 : index
    %c0_7 = arith.constant 0 : index
    %9 = vector.load %arg2[%c1, %c0_7] : memref<2x128xf32, #tpu.memory_space<vmem>>, vector<1x128xf32>
    %10 = vector.broadcast %9 : vector<1x128xf32> to vector<8x128xf32>
    %11 = arith.addf %8, %10 : vector<8x128xf32>
    %cst_8 = arith.constant 0.000000e+00 : f32
    %12 = vector.broadcast %cst_8 : f32 to vector<8x128xf32>
    %13 = arith.maximumf %11, %12 : vector<8x128xf32>
    %c0_9 = arith.constant 0 : index
    %c0_10 = arith.constant 0 : index
    %14 = vector.load %arg5[%c0_9, %c0_10] : memref<128x128xf32, #tpu.memory_space<vmem>>, vector<128x128xf32>
    %cst_11 = arith.constant dense<0.000000e+00> : vector<8x128xf32>
    %15 = tpu.matmul %13, %14, %cst_11 {dimension_numbers = #tpu.dot_dimension_numbers<[1], [0], [0], [1], [0, 0, 1, 1], [], []>} : vector<8x128xf32>, vector<128x128xf32>, vector<8x128xf32> -> vector<8x128xf32>
    %c0_12 = arith.constant 0 : index
    %c0_13 = arith.constant 0 : index
    %16 = vector.load %arg6[%c0_12, %c0_13] : memref<1x128xf32, #tpu.memory_space<vmem>>, vector<1x128xf32>
    %17 = vector.broadcast %16 : vector<1x128xf32> to vector<8x128xf32>
    %18 = arith.addf %15, %17 : vector<8x128xf32>
    %c0_14 = arith.constant 0 : index
    %c0_15 = arith.constant 0 : index
    %19 = vector.load %arg9[%c0_14, %c0_15] : memref<8x128xf32, #tpu.memory_space<vmem>>, vector<8x128xf32>
    tpu.vector_store %arg9[%c0_14, %c0_15], %18 {strides = array<i32>} : memref<8x128xf32, #tpu.memory_space<vmem>>, vector<8x128xf32>,
    %c0_16 = arith.constant 0 : index
    %c0_17 = arith.constant 0 : index
    %20 = vector.load %arg7[%c0_16, %c0_17] : memref<128x128xf32, #tpu.memory_space<vmem>>, vector<128x128xf32>
    %cst_18 = arith.constant dense<0.000000e+00> : vector<8x128xf32>
    %21 = tpu.matmul %18, %20, %cst_18 {dimension_numbers = #tpu.dot_dimension_numbers<[1], [0], [0], [1], [0, 0, 1, 1], [], []>} : vector<8x128xf32>, vector<128x128xf32>, vector<8x128xf32> -> vector<8x128xf32>
    %c0_19 = arith.constant 0 : index
    %c0_20 = arith.constant 0 : index
    %22 = vector.load %arg8[%c0_19, %c0_20] : memref<1x128xf32, #tpu.memory_space<vmem>>, vector<1x128xf32>
    %23 = vector.broadcast %22 : vector<1x128xf32> to vector<8x128xf32>
    %24 = arith.addf %21, %23 : vector<8x128xf32>
    %c1_i32 = arith.constant 1 : i32
    %25 = arith.cmpi eq, %arg0, %c1_i32 : i32
    %true = arith.constant true
    %26 = arith.xori %25, %true : i1
    %27 = arith.extui %26 : i1 to i32
    %c0_i32 = arith.constant 0 : i32
    %28 = arith.cmpi ne, %27, %c0_i32 : i32
    scf.if %28 {
      %cst_22 = arith.constant dense<0.000000e+00> : vector<128xf32>
      %31 = vector.multi_reduction <add>, %24, %cst_22 [0] : vector<8x128xf32> to vector<128xf32>
      %32 = vector.shape_cast %31 : vector<128xf32> to vector<1x128xf32>
      %33 = arith.mulf %24, %24 : vector<8x128xf32>
      %cst_23 = arith.constant dense<0.000000e+00> : vector<128xf32>
      %34 = vector.multi_reduction <add>, %33, %cst_23 [0] : vector<8x128xf32> to vector<128xf32>
      %35 = vector.shape_cast %34 : vector<128xf32> to vector<1x128xf32>
      %36 = tpu.concatenate %32, %35 in 0 : vector<1x128xf32>, vector<1x128xf32> -> vector<2x128xf32>
      %c0_24 = arith.constant 0 : index
      %c0_25 = arith.constant 0 : index
      %c0_26 = arith.constant 0 : index
      %37 = vector.load %arg10[%c0_24, %c0_25, %c0_26] : memref<1x2x128xf32, #tpu.memory_space<vmem>>, vector<1x2x128xf32>
      %38 = vector.shape_cast %37 : vector<1x2x128xf32> to vector<2x128xf32>
      %39 = vector.shape_cast %36 : vector<2x128xf32> to vector<1x2x128xf32>
      tpu.vector_store %arg10[%c0_24, %c0_25, %c0_26], %39 {strides = array<i32>} : memref<1x2x128xf32, #tpu.memory_space<vmem>>, vector<1x2x128xf32>,
    } else {
    }
    %29 = arith.extui %25 : i1 to i32
    %c0_i32_21 = arith.constant 0 : i32
    %30 = arith.cmpi ne, %29, %c0_i32_21 : i32
    scf.if %30 {
      %c8_i32 = arith.constant 8 : i32
      %31 = arith.muli %arg0, %c8_i32 : i32
      %32 = tpu.iota {dimensions = array<i32: 0>} : vector<8x128xi32>
      %33 = vector.broadcast %31 : i32 to vector<8x128xi32>
      %34 = arith.addi %33, %32 : vector<8x128xi32>
      %c12_i32 = arith.constant 12 : i32
      %35 = vector.broadcast %c12_i32 : i32 to vector<8x128xi32>
      %36 = arith.cmpi slt, %34, %35 : vector<8x128xi32>
      %cst_22 = arith.constant 0.000000e+00 : f32
      %37 = vector.broadcast %cst_22 : f32 to vector<8x128xf32>
      %38 = arith.select %36, %24, %37 : vector<8x128xi1>, vector<8x128xf32>
      %cst_23 = arith.constant dense<0.000000e+00> : vector<128xf32>
      %39 = vector.multi_reduction <add>, %38, %cst_23 [0] : vector<8x128xf32> to vector<128xf32>
      %40 = vector.shape_cast %39 : vector<128xf32> to vector<1x128xf32>
      %41 = arith.mulf %38, %38 : vector<8x128xf32>
      %cst_24 = arith.constant dense<0.000000e+00> : vector<128xf32>
      %42 = vector.multi_reduction <add>, %41, %cst_24 [0] : vector<8x128xf32> to vector<128xf32>
      %43 = vector.shape_cast %42 : vector<128xf32> to vector<1x128xf32>
      %44 = tpu.concatenate %40, %43 in 0 : vector<1x128xf32>, vector<1x128xf32> -> vector<2x128xf32>
      %c0_25 = arith.constant 0 : index
      %c0_26 = arith.constant 0 : index
      %c0_27 = arith.constant 0 : index
      %45 = vector.load %arg10[%c0_25, %c0_26, %c0_27] : memref<1x2x128xf32, #tpu.memory_space<vmem>>, vector<1x2x128xf32>
      %46 = vector.shape_cast %45 : vector<1x2x128xf32> to vector<2x128xf32>
      %47 = vector.shape_cast %44 : vector<2x128xf32> to vector<1x2x128xf32>
      tpu.vector_store %arg10[%c0_25, %c0_26, %c0_27], %47 {strides = array<i32>} : memref<1x2x128xf32, #tpu.memory_space<vmem>>, vector<1x2x128xf32>,
    } else {
    }
    return
  }
  func.func @transform_0(%arg0: i32) -> (i32, i32) {
    %c0_i32 = arith.constant 0 : i32
    %c0_i32_0 = arith.constant 0 : i32
    return %arg0, %c0_i32 : i32, i32
  }
  func.func @transform_1(%arg0: i32) -> (i32, i32) {
    %c0_i32 = arith.constant 0 : i32
    %c0_i32_0 = arith.constant 0 : i32
    %c0_i32_1 = arith.constant 0 : i32
    return %c0_i32, %c0_i32_0 : i32, i32
  }
  func.func @transform_2(%arg0: i32) -> (i32, i32) {
    %c0_i32 = arith.constant 0 : i32
    %c0_i32_0 = arith.constant 0 : i32
    %c0_i32_1 = arith.constant 0 : i32
    return %c0_i32, %c0_i32_0 : i32, i32
  }
  func.func @transform_3(%arg0: i32) -> (i32, i32) {
    %c0_i32 = arith.constant 0 : i32
    %c0_i32_0 = arith.constant 0 : i32
    %c0_i32_1 = arith.constant 0 : i32
    return %c0_i32, %c0_i32_0 : i32, i32
  }
  func.func @transform_4(%arg0: i32) -> (i32, i32) {
    %c0_i32 = arith.constant 0 : i32
    %c0_i32_0 = arith.constant 0 : i32
    %c0_i32_1 = arith.constant 0 : i32
    return %c0_i32, %c0_i32_0 : i32, i32
  }
  func.func @transform_5(%arg0: i32) -> (i32, i32) {
    %c0_i32 = arith.constant 0 : i32
    %c0_i32_0 = arith.constant 0 : i32
    %c0_i32_1 = arith.constant 0 : i32
    return %c0_i32, %c0_i32_0 : i32, i32
  }
  func.func @transform_6(%arg0: i32) -> (i32, i32) {
    %c0_i32 = arith.constant 0 : i32
    %c0_i32_0 = arith.constant 0 : i32
    %c0_i32_1 = arith.constant 0 : i32
    return %c0_i32, %c0_i32_0 : i32, i32
  }
  func.func @transform_7(%arg0: i32) -> (i32, i32) {
    %c0_i32 = arith.constant 0 : i32
    %c0_i32_0 = arith.constant 0 : i32
    %c0_i32_1 = arith.constant 0 : i32
    return %c0_i32, %c0_i32_0 : i32, i32
  }
  func.func @transform_8(%arg0: i32) -> (i32, i32) {
    %c0_i32 = arith.constant 0 : i32
    %c0_i32_0 = arith.constant 0 : i32
    return %arg0, %c0_i32 : i32, i32
  }
  func.func @transform_9(%arg0: i32) -> (i32, i32, i32) {
    %c0_i32 = arith.constant 0 : i32
    %c0_i32_0 = arith.constant 0 : i32
    %c0_i32_1 = arith.constant 0 : i32
    return %arg0, %c0_i32, %c0_i32_0 : i32, i32, i32
  }
}

module attributes {stable_mosaic.version = 11 : i64} {
  func.func @_decode_kernel(%arg0: i32, %arg1: memref<8x128xf32, #tpu.memory_space<vmem>>, %arg2: memref<2x128xf32, #tpu.memory_space<vmem>>, %arg3: memref<128x128xf32, #tpu.memory_space<vmem>>, %arg4: memref<1x128xf32, #tpu.memory_space<vmem>>, %arg5: memref<128x128xf32, #tpu.memory_space<vmem>>, %arg6: memref<1x128xf32, #tpu.memory_space<vmem>>, %arg7: memref<8x128xf32, #tpu.memory_space<vmem>>) attributes {dimension_semantics = [#tpu.dimension_semantics<parallel>], iteration_bounds = array<i64: 2>, scalar_prefetch = 0 : i64, scratch_operands = 0 : i64, tpu.core_type = #tpu.core_type<tc>, window_params = [{transform_indices = @transform_0, window_bounds = array<i64: 8, 128>}, {pipeline_mode = #tpu.pipeline_mode<synchronous>, transform_indices = @transform_1, window_bounds = array<i64: 2, 128>}, {pipeline_mode = #tpu.pipeline_mode<synchronous>, transform_indices = @transform_2, window_bounds = array<i64: 128, 128>}, {pipeline_mode = #tpu.pipeline_mode<synchronous>, transform_indices = @transform_3, window_bounds = array<i64: 1, 128>}, {pipeline_mode = #tpu.pipeline_mode<synchronous>, transform_indices = @transform_4, window_bounds = array<i64: 128, 128>}, {pipeline_mode = #tpu.pipeline_mode<synchronous>, transform_indices = @transform_5, window_bounds = array<i64: 1, 128>}, {transform_indices = @transform_6, window_bounds = array<i64: 8, 128>}]} {
    %c0 = arith.constant 0 : index
    %c0_0 = arith.constant 0 : index
    %0 = vector.load %arg1[%c0, %c0_0] : memref<8x128xf32, #tpu.memory_space<vmem>>, vector<8x128xf32>
    %c0_1 = arith.constant 0 : index
    %c0_2 = arith.constant 0 : index
    %1 = vector.load %arg3[%c0_1, %c0_2] : memref<128x128xf32, #tpu.memory_space<vmem>>, vector<128x128xf32>
    %cst = arith.constant dense<0.000000e+00> : vector<8x128xf32>
    %2 = tpu.matmul %0, %1, %cst {dimension_numbers = #tpu.dot_dimension_numbers<[1], [0], [0], [1], [0, 0, 1, 1], [], []>} : vector<8x128xf32>, vector<128x128xf32>, vector<8x128xf32> -> vector<8x128xf32>
    %c0_3 = arith.constant 0 : index
    %c0_4 = arith.constant 0 : index
    %3 = vector.load %arg4[%c0_3, %c0_4] : memref<1x128xf32, #tpu.memory_space<vmem>>, vector<1x128xf32>
    %4 = vector.broadcast %3 : vector<1x128xf32> to vector<8x128xf32>
    %5 = arith.addf %2, %4 : vector<8x128xf32>
    %c0_5 = arith.constant 0 : index
    %c0_6 = arith.constant 0 : index
    %6 = vector.load %arg2[%c0_5, %c0_6] : memref<2x128xf32, #tpu.memory_space<vmem>>, vector<1x128xf32>
    %7 = vector.broadcast %6 : vector<1x128xf32> to vector<8x128xf32>
    %8 = arith.mulf %5, %7 : vector<8x128xf32>
    %c1 = arith.constant 1 : index
    %c0_7 = arith.constant 0 : index
    %9 = vector.load %arg2[%c1, %c0_7] : memref<2x128xf32, #tpu.memory_space<vmem>>, vector<1x128xf32>
    %10 = vector.broadcast %9 : vector<1x128xf32> to vector<8x128xf32>
    %11 = arith.addf %8, %10 : vector<8x128xf32>
    %cst_8 = arith.constant 0.000000e+00 : f32
    %12 = vector.broadcast %cst_8 : f32 to vector<8x128xf32>
    %13 = arith.maximumf %11, %12 : vector<8x128xf32>
    %c0_9 = arith.constant 0 : index
    %c0_10 = arith.constant 0 : index
    %14 = vector.load %arg5[%c0_9, %c0_10] : memref<128x128xf32, #tpu.memory_space<vmem>>, vector<128x128xf32>
    %cst_11 = arith.constant dense<0.000000e+00> : vector<8x128xf32>
    %15 = tpu.matmul %13, %14, %cst_11 {dimension_numbers = #tpu.dot_dimension_numbers<[1], [0], [0], [1], [0, 0, 1, 1], [], []>} : vector<8x128xf32>, vector<128x128xf32>, vector<8x128xf32> -> vector<8x128xf32>
    %c0_12 = arith.constant 0 : index
    %c0_13 = arith.constant 0 : index
    %16 = vector.load %arg6[%c0_12, %c0_13] : memref<1x128xf32, #tpu.memory_space<vmem>>, vector<1x128xf32>
    %17 = vector.broadcast %16 : vector<1x128xf32> to vector<8x128xf32>
    %18 = arith.addf %15, %17 : vector<8x128xf32>
    %c0_14 = arith.constant 0 : index
    %c0_15 = arith.constant 0 : index
    %19 = vector.load %arg7[%c0_14, %c0_15] : memref<8x128xf32, #tpu.memory_space<vmem>>, vector<8x128xf32>
    tpu.vector_store %arg7[%c0_14, %c0_15], %18 {strides = array<i32>} : memref<8x128xf32, #tpu.memory_space<vmem>>, vector<8x128xf32>,
    return
  }
  func.func @transform_0(%arg0: i32) -> (i32, i32) {
    %c0_i32 = arith.constant 0 : i32
    %c0_i32_0 = arith.constant 0 : i32
    return %arg0, %c0_i32 : i32, i32
  }
  func.func @transform_1(%arg0: i32) -> (i32, i32) {
    %c0_i32 = arith.constant 0 : i32
    %c0_i32_0 = arith.constant 0 : i32
    %c0_i32_1 = arith.constant 0 : i32
    return %c0_i32, %c0_i32_0 : i32, i32
  }
  func.func @transform_2(%arg0: i32) -> (i32, i32) {
    %c0_i32 = arith.constant 0 : i32
    %c0_i32_0 = arith.constant 0 : i32
    %c0_i32_1 = arith.constant 0 : i32
    return %c0_i32, %c0_i32_0 : i32, i32
  }
  func.func @transform_3(%arg0: i32) -> (i32, i32) {
    %c0_i32 = arith.constant 0 : i32
    %c0_i32_0 = arith.constant 0 : i32
    %c0_i32_1 = arith.constant 0 : i32
    return %c0_i32, %c0_i32_0 : i32, i32
  }
  func.func @transform_4(%arg0: i32) -> (i32, i32) {
    %c0_i32 = arith.constant 0 : i32
    %c0_i32_0 = arith.constant 0 : i32
    %c0_i32_1 = arith.constant 0 : i32
    return %c0_i32, %c0_i32_0 : i32, i32
  }
  func.func @transform_5(%arg0: i32) -> (i32, i32) {
    %c0_i32 = arith.constant 0 : i32
    %c0_i32_0 = arith.constant 0 : i32
    %c0_i32_1 = arith.constant 0 : i32
    return %c0_i32, %c0_i32_0 : i32, i32
  }
  func.func @transform_6(%arg0: i32) -> (i32, i32) {
    %c0_i32 = arith.constant 0 : i32
    %c0_i32_0 = arith.constant 0 : i32
    return %arg0, %c0_i32 : i32, i32
  }
}

</mosaic_0001>

<llo_original>
// kernel: autoencoder_forward.3
$region0: #{autoencoder_forward.3}
  #allocation0 [shape = 'u32[]', space=smem, size = 0x4, offset = 0x4, fixed_abs, tag = 'smem constant byte address 0x4 - core index']
  #allocation1 [shape = 'u32[72,128]{1,0:T(1,128)}', space=vmem, size = 0x9000, scoped, tag = 'internal scratch']
  %s0 = inlined_call_operand.vmem [shape: f32[12,32], index: 0, kind: input, shape index: {}]
  %s1 = inlined_call_operand.vmem [shape: f32[32,128], index: 1, kind: input, shape index: {}]
  %s2 = inlined_call_operand.vmem [shape: f32[1,128], index: 2, kind: input, shape index: {}]
  %s3 = inlined_call_operand.vmem [shape: f32[2,2,128], index: 3, kind: output, shape index: {}]
  %s4 = sld [smem:[#allocation0]]
  $region53: #{autoencoder_forward.3} parent=0
    _
  %s6 = ssub.s32 1, %s4
  %s7 = scalar_select 0, %s6, %s4
  loop: start=0, step=1, limit=4
  $region2: #{autoencoder_forward.3} parent=0 // loop_pre_header
    _
  $region3: #{autoencoder_forward.3} parent=0 // loop_header
    %s9 = sphi 0, %s13
    %p10 = scmp.ge.s32.totalorder %s9, 4
    %s19 = sphi 0, %s21
    %s22 = sphi 0, %s19
    %s23 = sphi 0, %s22
    %s39 = sphi 0, %s23
    %s43 = sphi 0, %s43
    %s45 = sphi 0, %s43
    %s46 = sphi 0, %s45
    %s60 = sphi 0, %s46
    %s64 = sphi 0, %s64
    %s66 = sphi 0, %s64
    %s67 = sphi 0, %s66
    %s81 = sphi 0, %s67
    %s87 = sphi 0, %s89
    %s90 = sphi 0, %s87
    %s91 = sphi 0, %s90
    %s107 = sphi 0, %s91
  $region4: #{autoencoder_forward.3} parent=0 // loop_header_branch
    %12 = sbr.rel (%p10) target = $region8
  $region5: #{autoencoder_forward.3} parent=0 // loop_body
    %s14 = ssub.s32 %s9, 1
    %s15 = ssub.s32 %s9, 2
    %s16 = sadd.s32 %s9, 1
    %s17 = ssub.s32 %s9, %s16
    %p18 = scmp.eq.s32.totalorder %s17, 0
    %s20 = sadd.s32 %s19, 1
    %s21 = scalar_select %p18, %s19, %s20
    %p24 = pneg %p18
    %p25 = scmp.eq.s32.totalorder %s9, 1
    %p26 = por %p24, %p25
    %p27 = scmp.ne.s32.totalorder %s19, %s22
    %p28 = scmp.eq.s32.totalorder %s9, 0
    %p29 = por %p27, %p28
    %p30 = scmp.ne.s32.totalorder %s19, %s22
    %p31 = scmp.eq.s32.totalorder %s14, 1
    %p32 = por %p30, %p31
    %p33 = scmp.ne.s32.totalorder %s22, %s23
    %p34 = scmp.eq.s32.totalorder %s14, 0
    %p35 = por %p33, %p34
    %p36 = scmp.ne.s32.totalorder %s22, %s23
    %p37 = scmp.eq.s32.totalorder %s15, 1
    %p38 = por %p36, %p37
    %p40 = scmp.ne.s32.totalorder %s23, %s39
    %p41 = scmp.eq.s32.totalorder %s15, 0
    %p42 = por %p40, %p41
    %s44 = sadd.s32 %s43, 1
    %p47 = scmp.eq.s32.totalorder %s9, 1
    %p48 = scmp.ne.s32.totalorder %s43, %s45
    %p49 = scmp.eq.s32.totalorder %s9, 0
    %p50 = por %p48, %p49
    %p51 = scmp.ne.s32.totalorder %s43, %s45
    %p52 = scmp.eq.s32.totalorder %s14, 1
    %p53 = por %p51, %p52
    %p54 = scmp.ne.s32.totalorder %s45, %s46
    %p55 = scmp.eq.s32.totalorder %s14, 0
    %p56 = por %p54, %p55
    %p57 = scmp.ne.s32.totalorder %s45, %s46
    %p58 = scmp.eq.s32.totalorder %s15, 1
    %p59 = por %p57, %p58
    %p61 = scmp.ne.s32.totalorder %s46, %s60
    %p62 = scmp.eq.s32.totalorder %s15, 0
    %p63 = por %p61, %p62
    %s65 = sadd.s32 %s64, 1
    %p68 = scmp.eq.s32.totalorder %s9, 1
    %p69 = scmp.ne.s32.totalorder %s64, %s66
    %p70 = scmp.eq.s32.totalorder %s9, 0
    %p71 = por %p69, %p70
    %p72 = scmp.ne.s32.totalorder %s64, %s66
    %p73 = scmp.eq.s32.totalorder %s14, 1
    %p74 = por %p72, %p73
    %p75 = scmp.ne.s32.totalorder %s66, %s67
    %p76 = scmp.eq.s32.totalorder %s14, 0
    %p77 = por %p75, %p76
    %p78 = scmp.ne.s32.totalorder %s66, %s67
    %p79 = scmp.eq.s32.totalorder %s15, 1
    %p80 = por %p78, %p79
    %p82 = scmp.ne.s32.totalorder %s67, %s81
    %p83 = scmp.eq.s32.totalorder %s15, 0
    %p84 = por %p82, %p83
    %s85 = ssub.s32 %s9, %s16
    %p86 = scmp.eq.s32.totalorder %s85, 0
    %s88 = sadd.s32 %s87, 1
    %s89 = scalar_select %p86, %s87, %s88
    %p92 = pneg %p86
    %p93 = scmp.eq.s32.totalorder %s9, 1
    %p94 = por %p92, %p93
    %p95 = scmp.ne.s32.totalorder %s87, %s90
    %p96 = scmp.eq.s32.totalorder %s9, 0
    %p97 = por %p95, %p96
    %p98 = scmp.ne.s32.totalorder %s87, %s90
    %p99 = scmp.eq.s32.totalorder %s14, 1
    %p100 = por %p98, %p99
    %p101 = scmp.ne.s32.totalorder %s90, %s91
    %p102 = scmp.eq.s32.totalorder %s14, 0
    %p103 = por %p101, %p102
    %p104 = scmp.ne.s32.totalorder %s90, %s91
    %p105 = scmp.eq.s32.totalorder %s15, 1
    %p106 = por %p104, %p105
    %p108 = scmp.ne.s32.totalorder %s91, %s107
    %p109 = scmp.eq.s32.totalorder %s15, 0
    %p110 = por %p108, %p109
    %p111 = scmp.le.s32.totalorder 1, %s9
    %p112 = scmp.lt.s32.totalorder %s9, 3
    %p113 = pnand %p111, %p112
    %p114 = pneg %p113
    // Predicated region
    $region9: #{autoencoder_forward.3} parent=5 // pred_check
      _
    $region10: #{autoencoder_forward.3} parent=5 // pred_check_branch
      %116 = sbr.rel (%p113) target = $region12
    $region11: #{autoencoder_forward.3} parent=5 // pred_region
      %s117 = ssub.s32 %s9, 1
      // Predicated region
      $region13: #{autoencoder_forward.3} parent=11 // pred_check
        %p118 = pneg %p56
      $region14: #{autoencoder_forward.3} parent=11 // pred_check_branch
        %120 = sbr.rel (%p118) target = $region16
      $region15: #{autoencoder_forward.3} parent=11 // pred_region
        _
      $region16: #{autoencoder_forward.3} parent=11 // pred_fallthru
        _
      // Predicated region
      $region17: #{autoencoder_forward.3} parent=11 // pred_check
        %p121 = pneg %p77
      $region18: #{autoencoder_forward.3} parent=11 // pred_check_branch
        %123 = sbr.rel (%p121) target = $region20
      $region19: #{autoencoder_forward.3} parent=11 // pred_region
        _
      $region20: #{autoencoder_forward.3} parent=11 // pred_fallthru
        _
    $region12: #{autoencoder_forward.3} parent=5 // pred_fallthru
      _
    %p124 = scmp.lt.s32.totalorder %s9, 2
    // Predicated region
    $region21: #{autoencoder_forward.3} parent=5 // pred_check
      %p125 = pneg %p124
    $region22: #{autoencoder_forward.3} parent=5 // pred_check_branch
      %127 = sbr.rel (%p125) target = $region24
    $region23: #{autoencoder_forward.3} parent=5 // pred_region
      // Predicated region
      $region25: #{autoencoder_forward.3} parent=23 // pred_check
        %p128 = pneg %p29
      $region26: #{autoencoder_forward.3} parent=23 // pred_check_branch
        %130 = sbr.rel (%p128) target = $region28
      $region27: #{autoencoder_forward.3} parent=23 // pred_region
        %p131 = scmp.lt.s32.totalorder %s9, 1
        %s132 = scalar_select %p131, %s9, 1
        %s133 = smul.addr %s132, 8
        %s134 = scalar_lea.vmem %s0, %s133
      $region28: #{autoencoder_forward.3} parent=23 // pred_fallthru
        _
    $region24: #{autoencoder_forward.3} parent=5 // pred_fallthru
      _
    %p135 = scmp.le.s32.totalorder 1, %s9
    %p136 = scmp.lt.s32.totalorder %s9, 3
    %p137 = pnand %p135, %p136
    %p138 = pneg %p137
    // Predicated region
    $region29: #{autoencoder_forward.3} parent=5 // pred_check
      _
    $region30: #{autoencoder_forward.3} parent=5 // pred_check_branch
      %140 = sbr.rel (%p137) target = $region32
    $region31: #{autoencoder_forward.3} parent=5 // pred_region
      %s141 = ssub.s32 %s9, 1
      %p142 = scmp.lt.s32.totalorder %s14, 1
      %s143 = scalar_select %p142, %s14, 1
      %s144 = smul.addr %s143, 8
      %s145 = scalar_lea.vmem %s0, %s144
      %p146 = pneg %p35
      %p147 = pneg %p32
      %p148 = pneg %p56
      %p149 = pneg %p53
      %p150 = pneg %p77
      %p151 = pneg %p74
      %p152 = pneg %p103
      %p153 = pneg %p100
      %p154 = scmp.lt.s32.totalorder %s14, 1
      %s155 = scalar_select %p154, %s14, 1
      %s156 = smul.addr %s155, 2
      %s157 = scalar_lea.vmem %s3, %s156
      %p158 = scmp.lt.s32.totalorder %s14, 1
      %s159 = scalar_select %p158, %s14, 1
      %s160 = smul.addr %s159, 8
      %s161 = scalar_lea.vmem %s0, %s160
      %p162 = scmp.lt.s32.totalorder %s14, 1
      %s163 = scalar_select %p162, %s14, 1
      %s164 = smul.addr %s163, 2
      %s165 = scalar_lea.vmem %s3, %s164
      %v166 = vld [vmem:[%s161] sm:$0xff]
      %v167 = vld [vmem:[%s1] sm:$0xff]
      %v168 = vld [vmem:[%s1 + $0x8] sm:$0xff]
      %v169 = vld [vmem:[%s1 + $0x10] sm:$0xff]
      %v170 = vld [vmem:[%s1 + $0x18] sm:$0xff]
      %v171 = vld [vmem:[%s2] sm:$0x1]
      %v173 = vperm.slane %v171, 0
      %vm175 = vcmask 261120
      %v177 = vsel %vm175, %v166, 0
      %179 = vmatpush.msra.mxu0 0.0
      %180 = vmatpush.msra.mxu0 0.0
      %181 = vmatpush.msra.mxu0 0.0
      %182 = vmatpush.msra.mxu0 0.0
      %183 = vmatpush.msra.mxu0 0.0
      %184 = vmatpush.msra.mxu0 0.0
      %185 = vmatpush.msra.mxu0 0.0
      %186 = vmatpush.msra.mxu0 0.0
      %187 = vmatpush.msra.mxu0 0.0
      %188 = vmatpush.msra.mxu0 0.0
      %189 = vmatpush.msra.mxu0 0.0
      %190 = vmatpush.msra.mxu0 0.0
      %191 = vmatpush.msra.mxu0 %v170
      %192 = vmatpush.msra.mxu0 %v169
      %193 = vmatpush.msra.mxu0 %v168
      %194 = vmatpush.msra.mxu0 %v167
      %195 = vmatmul.f32.gmra.mxu0 %v177
      %v196 = vpop.f32.mrf.mxu0
      %v197 = vadd.f32 %v173, %v196
      %198 = vdwg.mxu0
      %p199 = scmp.eq.s32.totalorder %s14, 1
      %p200 = scmp.ne.s32.totalorder %s14, 1
      // Predicated region
      $region33: #{autoencoder_forward.3} parent=31 // pred_check
        %p201 = pneg %p200
      $region34: #{autoencoder_forward.3} parent=31 // pred_check_branch
        %203 = sbr.rel (%p201) target = $region36
      $region35: #{autoencoder_forward.3} parent=31 // pred_region
        %v204 = vrot.slane %v197, 4
        %v205 = vadd.f32 %v197, %v204
        %v206 = vrot.slane %v205, 2
        %v207 = vadd.f32 %v205, %v206
        %v208 = vrot.slane %v207, 1
        %v209 = vadd.f32 %v207, %v208
        %v210 = vmul.f32 %v197, %v197
        %v211 = vrot.slane %v210, 4
        %v212 = vadd.f32 %v210, %v211
        %v213 = vrot.slane %v212, 2
        %v214 = vadd.f32 %v212, %v213
        %v215 = vrot.slane %v214, 1
        %v216 = vadd.f32 %v214, %v215
        %vm217 = vcmask 1040384
        %v218 = vsel %vm217, %v209, %v216
        %219 = vst [vmem:[%s165] sm:$0x3] %v218
      $region36: #{autoencoder_forward.3} parent=31 // pred_fallthru
        _
      // Predicated region
      $region37: #{autoencoder_forward.3} parent=31 // pred_check
        %p220 = pneg %p199
      $region38: #{autoencoder_forward.3} parent=31 // pred_check_branch
        %222 = sbr.rel (%p220) target = $region40
      $region39: #{autoencoder_forward.3} parent=31 // pred_region
        %s223 = smul.u32 %s14, 8
        %v224 = vlaneseq
        %v225 = vshrl.u32 %v224, 7
        %v226 = vstv %s223
        %v227 = vadd.s32 %v226, %v225
        %vm228 = vcmp.lt.s32.totalorder %v227, 12
        %v229 = vsel %vm228, %v197, 0.0
        %v230 = vrot.slane %v229, 4
        %v231 = vadd.f32 %v229, %v230
        %v232 = vrot.slane %v231, 2
        %v233 = vadd.f32 %v231, %v232
        %v234 = vrot.slane %v233, 1
        %v235 = vadd.f32 %v233, %v234
        %v236 = vmul.f32 %v229, %v229
        %v237 = vrot.slane %v236, 4
        %v238 = vadd.f32 %v236, %v237
        %v239 = vrot.slane %v238, 2
        %v240 = vadd.f32 %v238, %v239
        %v241 = vrot.slane %v240, 1
        %v242 = vadd.f32 %v240, %v241
        %vm243 = vcmask 1040384
        %v244 = vsel %vm243, %v235, %v242
        %245 = vst [vmem:[%s165] sm:$0x3] %v244
      $region40: #{autoencoder_forward.3} parent=31 // pred_fallthru
        _
      %p246 = scmp.lt.s32.totalorder %s14, 1
      %s247 = scalar_select %p246, %s14, 1
      %s248 = smul.addr %s247, 2
      %s249 = scalar_lea.vmem %s3, %s248
      // Predicated region
      $region41: #{autoencoder_forward.3} parent=31 // pred_check
        %p250 = pneg %p100
      $region42: #{autoencoder_forward.3} parent=31 // pred_check_branch
        %252 = sbr.rel (%p250) target = $region44
      $region43: #{autoencoder_forward.3} parent=31 // pred_region
        _
      $region44: #{autoencoder_forward.3} parent=31 // pred_fallthru
        _
    $region32: #{autoencoder_forward.3} parent=5 // pred_fallthru
      _
    %p253 = scmp.le.s32.totalorder 2, %s9
    // Predicated region
    $region45: #{autoencoder_forward.3} parent=5 // pred_check
      %p254 = pneg %p253
    $region46: #{autoencoder_forward.3} parent=5 // pred_check_branch
      %256 = sbr.rel (%p254) target = $region48
    $region47: #{autoencoder_forward.3} parent=5 // pred_region
      %s257 = ssub.s32 %s9, 2
      // Predicated region
      $region49: #{autoencoder_forward.3} parent=47 // pred_check
        %p258 = pneg %p106
      $region50: #{autoencoder_forward.3} parent=47 // pred_check_branch
        %260 = sbr.rel (%p258) target = $region52
      $region51: #{autoencoder_forward.3} parent=47 // pred_region
        %p261 = scmp.lt.s32.totalorder %s15, 1
        %s262 = scalar_select %p261, %s15, 1
        %s263 = smul.addr %s262, 2
        %s264 = scalar_lea.vmem %s3, %s263
      $region52: #{autoencoder_forward.3} parent=47 // pred_fallthru
        _
    $region48: #{autoencoder_forward.3} parent=5 // pred_fallthru
      _
  $region6: #{autoencoder_forward.3} parent=0 // loop_footer
    %s13 = sadd.s32 1, %s9
  $region7: #{autoencoder_forward.3} parent=0 // loop_footer_branch
    %8 = sbr.rel target = $region3
  $region8: #{autoencoder_forward.3} parent=0 // loop_exit
    _

// kernel: autoencoder_forward.4
$region0: #{autoencoder_forward.4}
  #allocation0 [shape = 'u32[]', space=smem, size = 0x4, offset = 0x4, fixed_abs, tag = 'smem constant byte address 0x4 - core index']
  #allocation1 [shape = 'u32[72,128]{1,0:T(1,128)}', space=vmem, size = 0x9000, scoped, tag = 'internal scratch']
  %s0 = inlined_call_operand.vmem [shape: f32[12,32], index: 0, kind: input, shape index: {}]
  %s1 = inlined_call_operand.vmem [shape: f32[2,128], index: 1, kind: input, shape index: {}]
  %s2 = inlined_call_operand.vmem [shape: f32[32,128], index: 2, kind: input, shape index: {}]
  %s3 = inlined_call_operand.vmem [shape: f32[1,128], index: 3, kind: input, shape index: {}]
  %s4 = inlined_call_operand.vmem [shape: f32[128,128], index: 4, kind: input, shape index: {}]
  %s5 = inlined_call_operand.vmem [shape: f32[1,128], index: 5, kind: input, shape index: {}]
  %s6 = inlined_call_operand.vmem [shape: f32[128,128], index: 6, kind: input, shape index: {}]
  %s7 = inlined_call_operand.vmem [shape: f32[1,128], index: 7, kind: input, shape index: {}]
  %s8 = inlined_call_operand.vmem [shape: f32[12,128], index: 8, kind: output, shape index: {0}]
  %s9 = inlined_call_operand.vmem [shape: f32[2,2,128], index: 9, kind: output, shape index: {1}]
  %10 = xla_tuple %s8, %s9
  %s11 = sld [smem:[#allocation0]]
  $region81: #{autoencoder_forward.4} parent=0
    _
  %s13 = ssub.s32 1, %s11
  %s14 = scalar_select 0, %s13, %s11
  loop: start=0, step=1, limit=4
  $region2: #{autoencoder_forward.4} parent=0 // loop_pre_header
    _
  $region3: #{autoencoder_forward.4} parent=0 // loop_header
    %s16 = sphi 0, %s20
    %p17 = scmp.ge.s32.totalorder %s16, 4
    %s26 = sphi 0, %s28
    %s29 = sphi 0, %s26
    %s30 = sphi 0, %s29
    %s46 = sphi 0, %s30
    %s50 = sphi 0, %s50
    %s52 = sphi 0, %s50
    %s53 = sphi 0, %s52
    %s67 = sphi 0, %s53
    %s71 = sphi 0, %s71
    %s73 = sphi 0, %s71
    %s74 = sphi 0, %s73
    %s88 = sphi 0, %s74
    %s92 = sphi 0, %s92
    %s94 = sphi 0, %s92
    %s95 = sphi 0, %s94
    %s109 = sphi 0, %s95
    %s113 = sphi 0, %s113
    %s115 = sphi 0, %s113
    %s116 = sphi 0, %s115
    %s130 = sphi 0, %s116
    %s134 = sphi 0, %s134
    %s136 = sphi 0, %s134
    %s137 = sphi 0, %s136
    %s151 = sphi 0, %s137
    %s155 = sphi 0, %s155
    %s157 = sphi 0, %s155
    %s158 = sphi 0, %s157
    %s172 = sphi 0, %s158
    %s176 = sphi 0, %s176
    %s178 = sphi 0, %s176
    %s179 = sphi 0, %s178
    %s193 = sphi 0, %s179
    %s199 = sphi 0, %s201
    %s202 = sphi 0, %s199
    %s203 = sphi 0, %s202
    %s219 = sphi 0, %s203
    %s225 = sphi 0, %s227
    %s228 = sphi 0, %s225
    %s229 = sphi 0, %s228
    %s245 = sphi 0, %s229
  $region4: #{autoencoder_forward.4} parent=0 // loop_header_branch
    %19 = sbr.rel (%p17) target = $region8
  $region5: #{autoencoder_forward.4} parent=0 // loop_body
    %s21 = ssub.s32 %s16, 1
    %s22 = ssub.s32 %s16, 2
    %s23 = sadd.s32 %s16, 1
    %s24 = ssub.s32 %s16, %s23
    %p25 = scmp.eq.s32.totalorder %s24, 0
    %s27 = sadd.s32 %s26, 1
    %s28 = scalar_select %p25, %s26, %s27
    %p31 = pneg %p25
    %p32 = scmp.eq.s32.totalorder %s16, 1
    %p33 = por %p31, %p32
    %p34 = scmp.ne.s32.totalorder %s26, %s29
    %p35 = scmp.eq.s32.totalorder %s16, 0
    %p36 = por %p34, %p35
    %p37 = scmp.ne.s32.totalorder %s26, %s29
    %p38 = scmp.eq.s32.totalorder %s21, 1
    %p39 = por %p37, %p38
    %p40 = scmp.ne.s32.totalorder %s29, %s30
    %p41 = scmp.eq.s32.totalorder %s21, 0
    %p42 = por %p40, %p41
    %p43 = scmp.ne.s32.totalorder %s29, %s30
    %p44 = scmp.eq.s32.totalorder %s22, 1
    %p45 = por %p43, %p44
    %p47 = scmp.ne.s32.totalorder %s30, %s46
    %p48 = scmp.eq.s32.totalorder %s22, 0
    %p49 = por %p47, %p48
    %s51 = sadd.s32 %s50, 1
    %p54 = scmp.eq.s32.totalorder %s16, 1
    %p55 = scmp.ne.s32.totalorder %s50, %s52
    %p56 = scmp.eq.s32.totalorder %s16, 0
    %p57 = por %p55, %p56
    %p58 = scmp.ne.s32.totalorder %s50, %s52
    %p59 = scmp.eq.s32.totalorder %s21, 1
    %p60 = por %p58, %p59
    %p61 = scmp.ne.s32.totalorder %s52, %s53
    %p62 = scmp.eq.s32.totalorder %s21, 0
    %p63 = por %p61, %p62
    %p64 = scmp.ne.s32.totalorder %s52, %s53
    %p65 = scmp.eq.s32.totalorder %s22, 1
    %p66 = por %p64, %p65
    %p68 = scmp.ne.s32.totalorder %s53, %s67
    %p69 = scmp.eq.s32.totalorder %s22, 0
    %p70 = por %p68, %p69
    %s72 = sadd.s32 %s71, 1
    %p75 = scmp.eq.s32.totalorder %s16, 1
    %p76 = scmp.ne.s32.totalorder %s71, %s73
    %p77 = scmp.eq.s32.totalorder %s16, 0
    %p78 = por %p76, %p77
    %p79 = scmp.ne.s32.totalorder %s71, %s73
    %p80 = scmp.eq.s32.totalorder %s21, 1
    %p81 = por %p79, %p80
    %p82 = scmp.ne.s32.totalorder %s73, %s74
    %p83 = scmp.eq.s32.totalorder %s21, 0
    %p84 = por %p82, %p83
    %p85 = scmp.ne.s32.totalorder %s73, %s74
    %p86 = scmp.eq.s32.totalorder %s22, 1
    %p87 = por %p85, %p86
    %p89 = scmp.ne.s32.totalorder %s74, %s88
    %p90 = scmp.eq.s32.totalorder %s22, 0
    %p91 = por %p89, %p90
    %s93 = sadd.s32 %s92, 1
    %p96 = scmp.eq.s32.totalorder %s16, 1
    %p97 = scmp.ne.s32.totalorder %s92, %s94
    %p98 = scmp.eq.s32.totalorder %s16, 0
    %p99 = por %p97, %p98
    %p100 = scmp.ne.s32.totalorder %s92, %s94
    %p101 = scmp.eq.s32.totalorder %s21, 1
    %p102 = por %p100, %p101
    %p103 = scmp.ne.s32.totalorder %s94, %s95
    %p104 = scmp.eq.s32.totalorder %s21, 0
    %p105 = por %p103, %p104
    %p106 = scmp.ne.s32.totalorder %s94, %s95
    %p107 = scmp.eq.s32.totalorder %s22, 1
    %p108 = por %p106, %p107
    %p110 = scmp.ne.s32.totalorder %s95, %s109
    %p111 = scmp.eq.s32.totalorder %s22, 0
    %p112 = por %p110, %p111
    %s114 = sadd.s32 %s113, 1
    %p117 = scmp.eq.s32.totalorder %s16, 1
    %p118 = scmp.ne.s32.totalorder %s113, %s115
    %p119 = scmp.eq.s32.totalorder %s16, 0
    %p120 = por %p118, %p119
    %p121 = scmp.ne.s32.totalorder %s113, %s115
    %p122 = scmp.eq.s32.totalorder %s21, 1
    %p123 = por %p121, %p122
    %p124 = scmp.ne.s32.totalorder %s115, %s116
    %p125 = scmp.eq.s32.totalorder %s21, 0
    %p126 = por %p124, %p125
    %p127 = scmp.ne.s32.totalorder %s115, %s116
    %p128 = scmp.eq.s32.totalorder %s22, 1
    %p129 = por %p127, %p128
    %p131 = scmp.ne.s32.totalorder %s116, %s130
    %p132 = scmp.eq.s32.totalorder %s22, 0
    %p133 = por %p131, %p132
    %s135 = sadd.s32 %s134, 1
    %p138 = scmp.eq.s32.totalorder %s16, 1
    %p139 = scmp.ne.s32.totalorder %s134, %s136
    %p140 = scmp.eq.s32.totalorder %s16, 0
    %p141 = por %p139, %p140
    %p142 = scmp.ne.s32.totalorder %s134, %s136
    %p143 = scmp.eq.s32.totalorder %s21, 1
    %p144 = por %p142, %p143
    %p145 = scmp.ne.s32.totalorder %s136, %s137
    %p146 = scmp.eq.s32.totalorder %s21, 0
    %p147 = por %p145, %p146
    %p148 = scmp.ne.s32.totalorder %s136, %s137
    %p149 = scmp.eq.s32.totalorder %s22, 1
    %p150 = por %p148, %p149
    %p152 = scmp.ne.s32.totalorder %s137, %s151
    %p153 = scmp.eq.s32.totalorder %s22, 0
    %p154 = por %p152, %p153
    %s156 = sadd.s32 %s155, 1
    %p159 = scmp.eq.s32.totalorder %s16, 1
    %p160 = scmp.ne.s32.totalorder %s155, %s157
    %p161 = scmp.eq.s32.totalorder %s16, 0
    %p162 = por %p160, %p161
    %p163 = scmp.ne.s32.totalorder %s155, %s157
    %p164 = scmp.eq.s32.totalorder %s21, 1
    %p165 = por %p163, %p164
    %p166 = scmp.ne.s32.totalorder %s157, %s158
    %p167 = scmp.eq.s32.totalorder %s21, 0
    %p168 = por %p166, %p167
    %p169 = scmp.ne.s32.totalorder %s157, %s158
    %p170 = scmp.eq.s32.totalorder %s22, 1
    %p171 = por %p169, %p170
    %p173 = scmp.ne.s32.totalorder %s158, %s172
    %p174 = scmp.eq.s32.totalorder %s22, 0
    %p175 = por %p173, %p174
    %s177 = sadd.s32 %s176, 1
    %p180 = scmp.eq.s32.totalorder %s16, 1
    %p181 = scmp.ne.s32.totalorder %s176, %s178
    %p182 = scmp.eq.s32.totalorder %s16, 0
    %p183 = por %p181, %p182
    %p184 = scmp.ne.s32.totalorder %s176, %s178
    %p185 = scmp.eq.s32.totalorder %s21, 1
    %p186 = por %p184, %p185
    %p187 = scmp.ne.s32.totalorder %s178, %s179
    %p188 = scmp.eq.s32.totalorder %s21, 0
    %p189 = por %p187, %p188
    %p190 = scmp.ne.s32.totalorder %s178, %s179
    %p191 = scmp.eq.s32.totalorder %s22, 1
    %p192 = por %p190, %p191
    %p194 = scmp.ne.s32.totalorder %s179, %s193
    %p195 = scmp.eq.s32.totalorder %s22, 0
    %p196 = por %p194, %p195
    %s197 = ssub.s32 %s16, %s23
    %p198 = scmp.eq.s32.totalorder %s197, 0
    %s200 = sadd.s32 %s199, 1
    %s201 = scalar_select %p198, %s199, %s200
    %p204 = pneg %p198
    %p205 = scmp.eq.s32.totalorder %s16, 1
    %p206 = por %p204, %p205
    %p207 = scmp.ne.s32.totalorder %s199, %s202
    %p208 = scmp.eq.s32.totalorder %s16, 0
    %p209 = por %p207, %p208
    %p210 = scmp.ne.s32.totalorder %s199, %s202
    %p211 = scmp.eq.s32.totalorder %s21, 1
    %p212 = por %p210, %p211
    %p213 = scmp.ne.s32.totalorder %s202, %s203
    %p214 = scmp.eq.s32.totalorder %s21, 0
    %p215 = por %p213, %p214
    %p216 = scmp.ne.s32.totalorder %s202, %s203
    %p217 = scmp.eq.s32.totalorder %s22, 1
    %p218 = por %p216, %p217
    %p220 = scmp.ne.s32.totalorder %s203, %s219
    %p221 = scmp.eq.s32.totalorder %s22, 0
    %p222 = por %p220, %p221
    %s223 = ssub.s32 %s16, %s23
    %p224 = scmp.eq.s32.totalorder %s223, 0
    %s226 = sadd.s32 %s225, 1
    %s227 = scalar_select %p224, %s225, %s226
    %p230 = pneg %p224
    %p231 = scmp.eq.s32.totalorder %s16, 1
    %p232 = por %p230, %p231
    %p233 = scmp.ne.s32.totalorder %s225, %s228
    %p234 = scmp.eq.s32.totalorder %s16, 0
    %p235 = por %p233, %p234
    %p236 = scmp.ne.s32.totalorder %s225, %s228
    %p237 = scmp.eq.s32.totalorder %s21, 1
    %p238 = por %p236, %p237
    %p239 = scmp.ne.s32.totalorder %s228, %s229
    %p240 = scmp.eq.s32.totalorder %s21, 0
    %p241 = por %p239, %p240
    %p242 = scmp.ne.s32.totalorder %s228, %s229
    %p243 = scmp.eq.s32.totalorder %s22, 1
    %p244 = por %p242, %p243
    %p246 = scmp.ne.s32.totalorder %s229, %s245
    %p247 = scmp.eq.s32.totalorder %s22, 0
    %p248 = por %p246, %p247
    %p249 = scmp.le.s32.totalorder 1, %s16
    %p250 = scmp.lt.s32.totalorder %s16, 3
    %p251 = pnand %p249, %p250
    %p252 = pneg %p251
    // Predicated region
    $region9: #{autoencoder_forward.4} parent=5 // pred_check
      _
    $region10: #{autoencoder_forward.4} parent=5 // pred_check_branch
      %254 = sbr.rel (%p251) target = $region12
    $region11: #{autoencoder_forward.4} parent=5 // pred_region
      %s255 = ssub.s32 %s16, 1
      // Predicated region
      $region13: #{autoencoder_forward.4} parent=11 // pred_check
        %p256 = pneg %p63
      $region14: #{autoencoder_forward.4} parent=11 // pred_check_branch
        %258 = sbr.rel (%p256) target = $region16
      $region15: #{autoencoder_forward.4} parent=11 // pred_region
        _
      $region16: #{autoencoder_forward.4} parent=11 // pred_fallthru
        _
      // Predicated region
      $region17: #{autoencoder_forward.4} parent=11 // pred_check
        %p259 = pneg %p84
      $region18: #{autoencoder_forward.4} parent=11 // pred_check_branch
        %261 = sbr.rel (%p259) target = $region20
      $region19: #{autoencoder_forward.4} parent=11 // pred_region
        _
      $region20: #{autoencoder_forward.4} parent=11 // pred_fallthru
        _
      // Predicated region
      $region21: #{autoencoder_forward.4} parent=11 // pred_check
        %p262 = pneg %p105
      $region22: #{autoencoder_forward.4} parent=11 // pred_check_branch
        %264 = sbr.rel (%p262) target = $region24
      $region23: #{autoencoder_forward.4} parent=11 // pred_region
        _
      $region24: #{autoencoder_forward.4} parent=11 // pred_fallthru
        _
      // Predicated region
      $region25: #{autoencoder_forward.4} parent=11 // pred_check
        %p265 = pneg %p126
      $region26: #{autoencoder_forward.4} parent=11 // pred_check_branch
        %267 = sbr.rel (%p265) target = $region28
      $region27: #{autoencoder_forward.4} parent=11 // pred_region
        _
      $region28: #{autoencoder_forward.4} parent=11 // pred_fallthru
        _
      // Predicated region
      $region29: #{autoencoder_forward.4} parent=11 // pred_check
        %p268 = pneg %p147
      $region30: #{autoencoder_forward.4} parent=11 // pred_check_branch
        %270 = sbr.rel (%p268) target = $region32
      $region31: #{autoencoder_forward.4} parent=11 // pred_region
        _
      $region32: #{autoencoder_forward.4} parent=11 // pred_fallthru
        _
      // Predicated region
      $region33: #{autoencoder_forward.4} parent=11 // pred_check
        %p271 = pneg %p168
      $region34: #{autoencoder_forward.4} parent=11 // pred_check_branch
        %273 = sbr.rel (%p271) target = $region36
      $region35: #{autoencoder_forward.4} parent=11 // pred_region
        _
      $region36: #{autoencoder_forward.4} parent=11 // pred_fallthru
        _
      // Predicated region
      $region37: #{autoencoder_forward.4} parent=11 // pred_check
        %p274 = pneg %p189
      $region38: #{autoencoder_forward.4} parent=11 // pred_check_branch
        %276 = sbr.rel (%p274) target = $region40
      $region39: #{autoencoder_forward.4} parent=11 // pred_region
        _
      $region40: #{autoencoder_forward.4} parent=11 // pred_fallthru
        _
    $region12: #{autoencoder_forward.4} parent=5 // pred_fallthru
      _
    %p277 = scmp.lt.s32.totalorder %s16, 2
    // Predicated region
    $region41: #{autoencoder_forward.4} parent=5 // pred_check
      %p278 = pneg %p277
    $region42: #{autoencoder_forward.4} parent=5 // pred_check_branch
      %280 = sbr.rel (%p278) target = $region44
    $region43: #{autoencoder_forward.4} parent=5 // pred_region
      // Predicated region
      $region45: #{autoencoder_forward.4} parent=43 // pred_check
        %p281 = pneg %p36
      $region46: #{autoencoder_forward.4} parent=43 // pred_check_branch
        %283 = sbr.rel (%p281) target = $region48
      $region47: #{autoencoder_forward.4} parent=43 // pred_region
        %p284 = scmp.lt.s32.totalorder %s16, 1
        %s285 = scalar_select %p284, %s16, 1
        %s286 = smul.addr %s285, 8
        %s287 = scalar_lea.vmem %s0, %s286
      $region48: #{autoencoder_forward.4} parent=43 // pred_fallthru
        _
    $region44: #{autoencoder_forward.4} parent=5 // pred_fallthru
      _
    %p288 = scmp.le.s32.totalorder 1, %s16
    %p289 = scmp.lt.s32.totalorder %s16, 3
    %p290 = pnand %p288, %p289
    %p291 = pneg %p290
    // Predicated region
    $region49: #{autoencoder_forward.4} parent=5 // pred_check
      _
    $region50: #{autoencoder_forward.4} parent=5 // pred_check_branch
      %293 = sbr.rel (%p290) target = $region52
    $region51: #{autoencoder_forward.4} parent=5 // pred_region
      %s294 = ssub.s32 %s16, 1
      %p295 = scmp.lt.s32.totalorder %s21, 1
      %s296 = scalar_select %p295, %s21, 1
      %s297 = smul.addr %s296, 8
      %s298 = scalar_lea.vmem %s0, %s297
      %p299 = pneg %p42
      %p300 = pneg %p39
      %p301 = pneg %p63
      %p302 = pneg %p60
      %p303 = pneg %p84
      %p304 = pneg %p81
      %p305 = pneg %p105
      %p306 = pneg %p102
      %p307 = pneg %p126
      %p308 = pneg %p123
      %p309 = pneg %p147
      %p310 = pneg %p144
      %p311 = pneg %p168
      %p312 = pneg %p165
      %p313 = pneg %p189
      %p314 = pneg %p186
      %p315 = pneg %p215
      %p316 = pneg %p212
      %p317 = scmp.lt.s32.totalorder %s21, 1
      %s318 = scalar_select %p317, %s21, 1
      %s319 = smul.addr %s318, 8
      %s320 = scalar_lea.vmem %s8, %s319
      %p321 = pneg %p241
      %p322 = pneg %p238
      %p323 = scmp.lt.s32.totalorder %s21, 1
      %s324 = scalar_select %p323, %s21, 1
      %s325 = smul.addr %s324, 2
      %s326 = scalar_lea.vmem %s9, %s325
      %p327 = scmp.lt.s32.totalorder %s21, 1
      %s328 = scalar_select %p327, %s21, 1
      %s329 = smul.addr %s328, 8
      %s330 = scalar_lea.vmem %s0, %s329
      %p331 = scmp.lt.s32.totalorder %s21, 1
      %s332 = scalar_select %p331, %s21, 1
      %s333 = smul.addr %s332, 8
      %s334 = scalar_lea.vmem %s8, %s333
      %p335 = scmp.lt.s32.totalorder %s21, 1
      %s336 = scalar_select %p335, %s21, 1
      %s337 = smul.addr %s336, 2
      %s338 = scalar_lea.vmem %s9, %s337
      %v339 = vld [vmem:[%s330] sm:$0xff]
      %v340 = vld [vmem:[%s2] sm:$0xff]
      %v341 = vld [vmem:[%s2 + $0x8] sm:$0xff]
      %v342 = vld [vmem:[%s2 + $0x10] sm:$0xff]
      %v343 = vld [vmem:[%s2 + $0x18] sm:$0xff]
      %v344 = vld [vmem:[%s3] sm:$0x1]
      %v346 = vperm.slane %v344, 0
      %vm348 = vcmask 261120
      %v350 = vsel %vm348, %v339, 0
      %352 = vmatpush.msra.mxu0 0.0
      %353 = vmatpush.msra.mxu0 0.0
      %354 = vmatpush.msra.mxu0 0.0
      %355 = vmatpush.msra.mxu0 0.0
      %356 = vmatpush.msra.mxu0 0.0
      %357 = vmatpush.msra.mxu0 0.0
      %358 = vmatpush.msra.mxu0 0.0
      %359 = vmatpush.msra.mxu0 0.0
      %360 = vmatpush.msra.mxu0 0.0
      %361 = vmatpush.msra.mxu0 0.0
      %362 = vmatpush.msra.mxu0 0.0
      %363 = vmatpush.msra.mxu0 0.0
      %364 = vmatpush.msra.mxu0 %v343
      %365 = vmatpush.msra.mxu0 %v342
      %366 = vmatpush.msra.mxu0 %v341
      %367 = vmatpush.msra.mxu0 %v340
      %368 = vmatmul.f32.gmra.mxu0 %v350
      %v369 = vpop.f32.mrf.mxu0
      %v370 = vadd.f32 %v346, %v369
      %371 = vdwg.mxu0
      %v372 = vld [vmem:[%s1] sm:$0x1]
      %v373 = vperm.slane %v372, 0
      %v374 = vmul.f32 %v370, %v373
      %v375 = vld [vmem:[%s1 + $0x1] sm:$0x1]
      %v376 = vperm.slane %v375, 0
      %v377 = vadd.f32 %v374, %v376
      %v378 = vmax.f32 %v377, 0.0
      %v379 = vld [vmem:[%s4] sm:$0xff]
      %v380 = vld [vmem:[%s4 + $0x8] sm:$0xff]
      %v381 = vld [vmem:[%s4 + $0x10] sm:$0xff]
      %v382 = vld [vmem:[%s4 + $0x18] sm:$0xff]
      %v383 = vld [vmem:[%s4 + $0x20] sm:$0xff]
      %v384 = vld [vmem:[%s4 + $0x28] sm:$0xff]
      %v385 = vld [vmem:[%s4 + $0x30] sm:$0xff]
      %v386 = vld [vmem:[%s4 + $0x38] sm:$0xff]
      %v387 = vld [vmem:[%s4 + $0x40] sm:$0xff]
      %v388 = vld [vmem:[%s4 + $0x48] sm:$0xff]
      %v389 = vld [vmem:[%s4 + $0x50] sm:$0xff]
      %v390 = vld [vmem:[%s4 + $0x58] sm:$0xff]
      %v391 = vld [vmem:[%s4 + $0x60] sm:$0xff]
      %v392 = vld [vmem:[%s4 + $0x68] sm:$0xff]
      %v393 = vld [vmem:[%s4 + $0x70] sm:$0xff]
      %v394 = vld [vmem:[%s4 + $0x78] sm:$0xff]
      %v395 = vld [vmem:[%s5] sm:$0x1]
      %v397 = vperm.slane %v395, 0
      %399 = vmatpush.msra.mxu0 %v394
      %400 = vmatpush.msra.mxu0 %v393
      %401 = vmatpush.msra.mxu0 %v392
      %402 = vmatpush.msra.mxu0 %v391
      %403 = vmatpush.msra.mxu0 %v390
      %404 = vmatpush.msra.mxu0 %v389
      %405 = vmatpush.msra.mxu0 %v388
      %406 = vmatpush.msra.mxu0 %v387
      %407 = vmatpush.msra.mxu0 %v386
      %408 = vmatpush.msra.mxu0 %v385
      %409 = vmatpush.msra.mxu0 %v384
      %410 = vmatpush.msra.mxu0 %v383
      %411 = vmatpush.msra.mxu0 %v382
      %412 = vmatpush.msra.mxu0 %v381
      %413 = vmatpush.msra.mxu0 %v380
      %414 = vmatpush.msra.mxu0 %v379
      %415 = vmatmul.f32.gmra.mxu0 %v378
      %v416 = vpop.f32.mrf.mxu0
      %v417 = vadd.f32 %v397, %v416
      %418 = vdwg.mxu0
      %419 = vst [vmem:[%s334] sm:$0xff] %v417
      %v420 = vld [vmem:[%s6] sm:$0xff]
      %v421 = vld [vmem:[%s6 + $0x8] sm:$0xff]
      %v422 = vld [vmem:[%s6 + $0x10] sm:$0xff]
      %v423 = vld [vmem:[%s6 + $0x18] sm:$0xff]
      %v424 = vld [vmem:[%s6 + $0x20] sm:$0xff]
      %v425 = vld [vmem:[%s6 + $0x28] sm:$0xff]
      %v426 = vld [vmem:[%s6 + $0x30] sm:$0xff]
      %v427 = vld [vmem:[%s6 + $0x38] sm:$0xff]
      %v428 = vld [vmem:[%s6 + $0x40] sm:$0xff]
      %v429 = vld [vmem:[%s6 + $0x48] sm:$0xff]
      %v430 = vld [vmem:[%s6 + $0x50] sm:$0xff]
      %v431 = vld [vmem:[%s6 + $0x58] sm:$0xff]
      %v432 = vld [vmem:[%s6 + $0x60] sm:$0xff]
      %v433 = vld [vmem:[%s6 + $0x68] sm:$0xff]
      %v434 = vld [vmem:[%s6 + $0x70] sm:$0xff]
      %v435 = vld [vmem:[%s6 + $0x78] sm:$0xff]
      %v436 = vld [vmem:[%s7] sm:$0x1]
      %v438 = vperm.slane %v436, 0
      %440 = vmatpush.msra.mxu0 %v435
      %441 = vmatpush.msra.mxu0 %v434
      %442 = vmatpush.msra.mxu0 %v433
      %443 = vmatpush.msra.mxu0 %v432
      %444 = vmatpush.msra.mxu0 %v431
      %445 = vmatpush.msra.mxu0 %v430
      %446 = vmatpush.msra.mxu0 %v429
      %447 = vmatpush.msra.mxu0 %v428
      %448 = vmatpush.msra.mxu0 %v427
      %449 = vmatpush.msra.mxu0 %v426
      %450 = vmatpush.msra.mxu0 %v425
      %451 = vmatpush.msra.mxu0 %v424
      %452 = vmatpush.msra.mxu0 %v423
      %453 = vmatpush.msra.mxu0 %v422
      %454 = vmatpush.msra.mxu0 %v421
      %455 = vmatpush.msra.mxu0 %v420
      %456 = vmatmul.f32.gmra.mxu0 %v417
      %v457 = vpop.f32.mrf.mxu0
      %v458 = vadd.f32 %v438, %v457
      %459 = vdwg.mxu0
      %p460 = scmp.eq.s32.totalorder %s21, 1
      %p461 = scmp.ne.s32.totalorder %s21, 1
      // Predicated region
      $region53: #{autoencoder_forward.4} parent=51 // pred_check
        %p462 = pneg %p461
      $region54: #{autoencoder_forward.4} parent=51 // pred_check_branch
        %464 = sbr.rel (%p462) target = $region56
      $region55: #{autoencoder_forward.4} parent=51 // pred_region
        %v465 = vrot.slane %v458, 4
        %v466 = vadd.f32 %v458, %v465
        %v467 = vrot.slane %v466, 2
        %v468 = vadd.f32 %v466, %v467
        %v469 = vrot.slane %v468, 1
        %v470 = vadd.f32 %v468, %v469
        %v471 = vmul.f32 %v458, %v458
        %v472 = vrot.slane %v471, 4
        %v473 = vadd.f32 %v471, %v472
        %v474 = vrot.slane %v473, 2
        %v475 = vadd.f32 %v473, %v474
        %v476 = vrot.slane %v475, 1
        %v477 = vadd.f32 %v475, %v476
        %vm478 = vcmask 1040384
        %v479 = vsel %vm478, %v470, %v477
        %480 = vst [vmem:[%s338] sm:$0x3] %v479
      $region56: #{autoencoder_forward.4} parent=51 // pred_fallthru
        _
      // Predicated region
      $region57: #{autoencoder_forward.4} parent=51 // pred_check
        %p481 = pneg %p460
      $region58: #{autoencoder_forward.4} parent=51 // pred_check_branch
        %483 = sbr.rel (%p481) target = $region60
      $region59: #{autoencoder_forward.4} parent=51 // pred_region
        %s484 = smul.u32 %s21, 8
        %v485 = vlaneseq
        %v486 = vshrl.u32 %v485, 7
        %v487 = vstv %s484
        %v488 = vadd.s32 %v487, %v486
        %vm489 = vcmp.lt.s32.totalorder %v488, 12
        %v490 = vsel %vm489, %v458, 0.0
        %v491 = vrot.slane %v490, 4
        %v492 = vadd.f32 %v490, %v491
        %v493 = vrot.slane %v492, 2
        %v494 = vadd.f32 %v492, %v493
        %v495 = vrot.slane %v494, 1
        %v496 = vadd.f32 %v494, %v495
        %v497 = vmul.f32 %v490, %v490
        %v498 = vrot.slane %v497, 4
        %v499 = vadd.f32 %v497, %v498
        %v500 = vrot.slane %v499, 2
        %v501 = vadd.f32 %v499, %v500
        %v502 = vrot.slane %v501, 1
        %v503 = vadd.f32 %v501, %v502
        %vm504 = vcmask 1040384
        %v505 = vsel %vm504, %v496, %v503
        %506 = vst [vmem:[%s338] sm:$0x3] %v505
      $region60: #{autoencoder_forward.4} parent=51 // pred_fallthru
        _
      %p507 = scmp.lt.s32.totalorder %s21, 1
      %s508 = scalar_select %p507, %s21, 1
      %s509 = smul.addr %s508, 8
      %s510 = scalar_lea.vmem %s8, %s509
      %p511 = scmp.lt.s32.totalorder %s21, 1
      %s512 = scalar_select %p511, %s21, 1
      %s513 = smul.addr %s512, 2
      %s514 = scalar_lea.vmem %s9, %s513
      // Predicated region
      $region61: #{autoencoder_forward.4} parent=51 // pred_check
        %p515 = pneg %p212
      $region62: #{autoencoder_forward.4} parent=51 // pred_check_branch
        %517 = sbr.rel (%p515) target = $region64
      $region63: #{autoencoder_forward.4} parent=51 // pred_region
        _
      $region64: #{autoencoder_forward.4} parent=51 // pred_fallthru
        _
      // Predicated region
      $region65: #{autoencoder_forward.4} parent=51 // pred_check
        %p518 = pneg %p238
      $region66: #{autoencoder_forward.4} parent=51 // pred_check_branch
        %520 = sbr.rel (%p518) target = $region68
      $region67: #{autoencoder_forward.4} parent=51 // pred_region
        _
      $region68: #{autoencoder_forward.4} parent=51 // pred_fallthru
        _
    $region52: #{autoencoder_forward.4} parent=5 // pred_fallthru
      _
    %p521 = scmp.le.s32.totalorder 2, %s16
    // Predicated region
    $region69: #{autoencoder_forward.4} parent=5 // pred_check
      %p522 = pneg %p521
    $region70: #{autoencoder_forward.4} parent=5 // pred_check_branch
      %524 = sbr.rel (%p522) target = $region72
    $region71: #{autoencoder_forward.4} parent=5 // pred_region
      %s525 = ssub.s32 %s16, 2
      // Predicated region
      $region73: #{autoencoder_forward.4} parent=71 // pred_check
        %p526 = pneg %p218
      $region74: #{autoencoder_forward.4} parent=71 // pred_check_branch
        %528 = sbr.rel (%p526) target = $region76
      $region75: #{autoencoder_forward.4} parent=71 // pred_region
        %p529 = scmp.lt.s32.totalorder %s22, 1
        %s530 = scalar_select %p529, %s22, 1
        %s531 = smul.addr %s530, 8
        %s532 = scalar_lea.vmem %s8, %s531
      $region76: #{autoencoder_forward.4} parent=71 // pred_fallthru
        _
      // Predicated region
      $region77: #{autoencoder_forward.4} parent=71 // pred_check
        %p533 = pneg %p244
      $region78: #{autoencoder_forward.4} parent=71 // pred_check_branch
        %535 = sbr.rel (%p533) target = $region80
      $region79: #{autoencoder_forward.4} parent=71 // pred_region
        %p536 = scmp.lt.s32.totalorder %s22, 1
        %s537 = scalar_select %p536, %s22, 1
        %s538 = smul.addr %s537, 2
        %s539 = scalar_lea.vmem %s9, %s538
      $region80: #{autoencoder_forward.4} parent=71 // pred_fallthru
        _
    $region72: #{autoencoder_forward.4} parent=5 // pred_fallthru
      _
  $region6: #{autoencoder_forward.4} parent=0 // loop_footer
    %s20 = sadd.s32 1, %s16
  $region7: #{autoencoder_forward.4} parent=0 // loop_footer_branch
    %15 = sbr.rel target = $region3
  $region8: #{autoencoder_forward.4} parent=0 // loop_exit
    _

// kernel: autoencoder_forward.5
$region0: #{autoencoder_forward.5}
  #allocation0 [shape = 'u32[]', space=smem, size = 0x4, offset = 0x4, fixed_abs, tag = 'smem constant byte address 0x4 - core index']
  #allocation1 [shape = 'u32[72,128]{1,0:T(1,128)}', space=vmem, size = 0x9000, scoped, tag = 'internal scratch']
  %s0 = inlined_call_operand.vmem [shape: f32[12,128], index: 0, kind: input, shape index: {}]
  %s1 = inlined_call_operand.vmem [shape: f32[2,128], index: 1, kind: input, shape index: {}]
  %s2 = inlined_call_operand.vmem [shape: f32[128,128], index: 2, kind: input, shape index: {}]
  %s3 = inlined_call_operand.vmem [shape: f32[1,128], index: 3, kind: input, shape index: {}]
  %s4 = inlined_call_operand.vmem [shape: f32[128,128], index: 4, kind: input, shape index: {}]
  %s5 = inlined_call_operand.vmem [shape: f32[1,128], index: 5, kind: input, shape index: {}]
  %s6 = inlined_call_operand.hbm [shape: f32[12,128], index: 6, kind: output, shape index: {}]
  %s7 = sld [smem:[#allocation0]]
  $region57: #{autoencoder_forward.5} parent=0
    _
  %s9 = ssub.s32 1, %s7
  %s10 = scalar_select 0, %s9, %s7
  $region1: #{autoencoder_forward.5} parent=0
    #allocation2 [shape = 'u8[8192]{0}', space=vmem, size = 0x2000, scoped, tag = 'output window, operand 0']
    #allocation3 [shape = 's32[2]{0}', space=sflag, size = 0x8, scoped, tag = 'scoped memory for autoencoder_forward.5']
    %11 = vsyncpa [#allocation3], 0
    %s12 = scalar_lea.sflag [#allocation3], 1
    %13 = vsyncpa %s12, 0
    loop: start=0, step=1, limit=4
    $region2: #{autoencoder_forward.5} parent=1 // loop_pre_header
      _
    $region3: #{autoencoder_forward.5} parent=1 // loop_header
      %s15 = sphi 0, %s19
      %p16 = scmp.ge.s32.totalorder %s15, 4
      %s25 = sphi 0, %s27
      %s28 = sphi 0, %s25
      %s29 = sphi 0, %s28
      %s45 = sphi 0, %s29
      %s49 = sphi 0, %s49
      %s51 = sphi 0, %s49
      %s52 = sphi 0, %s51
      %s66 = sphi 0, %s52
      %s70 = sphi 0, %s70
      %s72 = sphi 0, %s70
      %s73 = sphi 0, %s72
      %s87 = sphi 0, %s73
      %s91 = sphi 0, %s91
      %s93 = sphi 0, %s91
      %s94 = sphi 0, %s93
      %s108 = sphi 0, %s94
      %s112 = sphi 0, %s112
      %s114 = sphi 0, %s112
      %s115 = sphi 0, %s114
      %s129 = sphi 0, %s115
      %s133 = sphi 0, %s133
      %s135 = sphi 0, %s133
      %s136 = sphi 0, %s135
      %s150 = sphi 0, %s136
      %s156 = sphi 0, %s158
      %s159 = sphi 0, %s156
      %s160 = sphi 0, %s159
      %s176 = sphi 0, %s160
    $region4: #{autoencoder_forward.5} parent=1 // loop_header_branch
      %18 = sbr.rel (%p16) target = $region8
    $region5: #{autoencoder_forward.5} parent=1 // loop_body
      %s20 = ssub.s32 %s15, 1
      %s21 = ssub.s32 %s15, 2
      %s22 = sadd.s32 %s15, 1
      %s23 = ssub.s32 %s15, %s22
      %p24 = scmp.eq.s32.totalorder %s23, 0
      %s26 = sadd.s32 %s25, 1
      %s27 = scalar_select %p24, %s25, %s26
      %p30 = pneg %p24
      %p31 = scmp.eq.s32.totalorder %s15, 1
      %p32 = por %p30, %p31
      %p33 = scmp.ne.s32.totalorder %s25, %s28
      %p34 = scmp.eq.s32.totalorder %s15, 0
      %p35 = por %p33, %p34
      %p36 = scmp.ne.s32.totalorder %s25, %s28
      %p37 = scmp.eq.s32.totalorder %s20, 1
      %p38 = por %p36, %p37
      %p39 = scmp.ne.s32.totalorder %s28, %s29
      %p40 = scmp.eq.s32.totalorder %s20, 0
      %p41 = por %p39, %p40
      %p42 = scmp.ne.s32.totalorder %s28, %s29
      %p43 = scmp.eq.s32.totalorder %s21, 1
      %p44 = por %p42, %p43
      %p46 = scmp.ne.s32.totalorder %s29, %s45
      %p47 = scmp.eq.s32.totalorder %s21, 0
      %p48 = por %p46, %p47
      %s50 = sadd.s32 %s49, 1
      %p53 = scmp.eq.s32.totalorder %s15, 1
      %p54 = scmp.ne.s32.totalorder %s49, %s51
      %p55 = scmp.eq.s32.totalorder %s15, 0
      %p56 = por %p54, %p55
      %p57 = scmp.ne.s32.totalorder %s49, %s51
      %p58 = scmp.eq.s32.totalorder %s20, 1
      %p59 = por %p57, %p58
      %p60 = scmp.ne.s32.totalorder %s51, %s52
      %p61 = scmp.eq.s32.totalorder %s20, 0
      %p62 = por %p60, %p61
      %p63 = scmp.ne.s32.totalorder %s51, %s52
      %p64 = scmp.eq.s32.totalorder %s21, 1
      %p65 = por %p63, %p64
      %p67 = scmp.ne.s32.totalorder %s52, %s66
      %p68 = scmp.eq.s32.totalorder %s21, 0
      %p69 = por %p67, %p68
      %s71 = sadd.s32 %s70, 1
      %p74 = scmp.eq.s32.totalorder %s15, 1
      %p75 = scmp.ne.s32.totalorder %s70, %s72
      %p76 = scmp.eq.s32.totalorder %s15, 0
      %p77 = por %p75, %p76
      %p78 = scmp.ne.s32.totalorder %s70, %s72
      %p79 = scmp.eq.s32.totalorder %s20, 1
      %p80 = por %p78, %p79
      %p81 = scmp.ne.s32.totalorder %s72, %s73
      %p82 = scmp.eq.s32.totalorder %s20, 0
      %p83 = por %p81, %p82
      %p84 = scmp.ne.s32.totalorder %s72, %s73
      %p85 = scmp.eq.s32.totalorder %s21, 1
      %p86 = por %p84, %p85
      %p88 = scmp.ne.s32.totalorder %s73, %s87
      %p89 = scmp.eq.s32.totalorder %s21, 0
      %p90 = por %p88, %p89
      %s92 = sadd.s32 %s91, 1
      %p95 = scmp.eq.s32.totalorder %s15, 1
      %p96 = scmp.ne.s32.totalorder %s91, %s93
      %p97 = scmp.eq.s32.totalorder %s15, 0
      %p98 = por %p96, %p97
      %p99 = scmp.ne.s32.totalorder %s91, %s93
      %p100 = scmp.eq.s32.totalorder %s20, 1
      %p101 = por %p99, %p100
      %p102 = scmp.ne.s32.totalorder %s93, %s94
      %p103 = scmp.eq.s32.totalorder %s20, 0
      %p104 = por %p102, %p103
      %p105 = scmp.ne.s32.totalorder %s93, %s94
      %p106 = scmp.eq.s32.totalorder %s21, 1
      %p107 = por %p105, %p106
      %p109 = scmp.ne.s32.totalorder %s94, %s108
      %p110 = scmp.eq.s32.totalorder %s21, 0
      %p111 = por %p109, %p110
      %s113 = sadd.s32 %s112, 1
      %p116 = scmp.eq.s32.totalorder %s15, 1
      %p117 = scmp.ne.s32.totalorder %s112, %s114
      %p118 = scmp.eq.s32.totalorder %s15, 0
      %p119 = por %p117, %p118
      %p120 = scmp.ne.s32.totalorder %s112, %s114
      %p121 = scmp.eq.s32.totalorder %s20, 1
      %p122 = por %p120, %p121
      %p123 = scmp.ne.s32.totalorder %s114, %s115
      %p124 = scmp.eq.s32.totalorder %s20, 0
      %p125 = por %p123, %p124
      %p126 = scmp.ne.s32.totalorder %s114, %s115
      %p127 = scmp.eq.s32.totalorder %s21, 1
      %p128 = por %p126, %p127
      %p130 = scmp.ne.s32.totalorder %s115, %s129
      %p131 = scmp.eq.s32.totalorder %s21, 0
      %p132 = por %p130, %p131
      %s134 = sadd.s32 %s133, 1
      %p137 = scmp.eq.s32.totalorder %s15, 1
      %p138 = scmp.ne.s32.totalorder %s133, %s135
      %p139 = scmp.eq.s32.totalorder %s15, 0
      %p140 = por %p138, %p139
      %p141 = scmp.ne.s32.totalorder %s133, %s135
      %p142 = scmp.eq.s32.totalorder %s20, 1
      %p143 = por %p141, %p142
      %p144 = scmp.ne.s32.totalorder %s135, %s136
      %p145 = scmp.eq.s32.totalorder %s20, 0
      %p146 = por %p144, %p145
      %p147 = scmp.ne.s32.totalorder %s135, %s136
      %p148 = scmp.eq.s32.totalorder %s21, 1
      %p149 = por %p147, %p148
      %p151 = scmp.ne.s32.totalorder %s136, %s150
      %p152 = scmp.eq.s32.totalorder %s21, 0
      %p153 = por %p151, %p152
      %s154 = ssub.s32 %s15, %s22
      %p155 = scmp.eq.s32.totalorder %s154, 0
      %s157 = sadd.s32 %s156, 1
      %s158 = scalar_select %p155, %s156, %s157
      %p161 = pneg %p155
      %p162 = scmp.eq.s32.totalorder %s15, 1
      %p163 = por %p161, %p162
      %p164 = scmp.ne.s32.totalorder %s156, %s159
      %p165 = scmp.eq.s32.totalorder %s15, 0
      %p166 = por %p164, %p165
      %p167 = scmp.ne.s32.totalorder %s156, %s159
      %p168 = scmp.eq.s32.totalorder %s20, 1
      %p169 = por %p167, %p168
      %p170 = scmp.ne.s32.totalorder %s159, %s160
      %p171 = scmp.eq.s32.totalorder %s20, 0
      %p172 = por %p170, %p171
      %p173 = scmp.ne.s32.totalorder %s159, %s160
      %p174 = scmp.eq.s32.totalorder %s21, 1
      %p175 = por %p173, %p174
      %p177 = scmp.ne.s32.totalorder %s160, %s176
      %p178 = scmp.eq.s32.totalorder %s21, 0
      %p179 = por %p177, %p178
      %p180 = scmp.le.s32.totalorder 1, %s15
      %p181 = scmp.lt.s32.totalorder %s15, 3
      %p182 = pnand %p180, %p181
      %p183 = pneg %p182
      // Predicated region
      $region9: #{autoencoder_forward.5} parent=5 // pred_check
        _
      $region10: #{autoencoder_forward.5} parent=5 // pred_check_branch
        %185 = sbr.rel (%p182) target = $region12
      $region11: #{autoencoder_forward.5} parent=5 // pred_region
        %s186 = ssub.s32 %s15, 1
        // Predicated region
        $region13: #{autoencoder_forward.5} parent=11 // pred_check
          %p187 = pneg %p62
        $region14: #{autoencoder_forward.5} parent=11 // pred_check_branch
          %189 = sbr.rel (%p187) target = $region16
        $region15: #{autoencoder_forward.5} parent=11 // pred_region
          _
        $region16: #{autoencoder_forward.5} parent=11 // pred_fallthru
          _
        // Predicated region
        $region17: #{autoencoder_forward.5} parent=11 // pred_check
          %p190 = pneg %p83
        $region18: #{autoencoder_forward.5} parent=11 // pred_check_branch
          %192 = sbr.rel (%p190) target = $region20
        $region19: #{autoencoder_forward.5} parent=11 // pred_region
          _
        $region20: #{autoencoder_forward.5} parent=11 // pred_fallthru
          _
        // Predicated region
        $region21: #{autoencoder_forward.5} parent=11 // pred_check
          %p193 = pneg %p104
        $region22: #{autoencoder_forward.5} parent=11 // pred_check_branch
          %195 = sbr.rel (%p193) target = $region24
        $region23: #{autoencoder_forward.5} parent=11 // pred_region
          _
        $region24: #{autoencoder_forward.5} parent=11 // pred_fallthru
          _
        // Predicated region
        $region25: #{autoencoder_forward.5} parent=11 // pred_check
          %p196 = pneg %p125
        $region26: #{autoencoder_forward.5} parent=11 // pred_check_branch
          %198 = sbr.rel (%p196) target = $region28
        $region27: #{autoencoder_forward.5} parent=11 // pred_region
          _
        $region28: #{autoencoder_forward.5} parent=11 // pred_fallthru
          _
        // Predicated region
        $region29: #{autoencoder_forward.5} parent=11 // pred_check
          %p199 = pneg %p146
        $region30: #{autoencoder_forward.5} parent=11 // pred_check_branch
          %201 = sbr.rel (%p199) target = $region32
        $region31: #{autoencoder_forward.5} parent=11 // pred_region
          _
        $region32: #{autoencoder_forward.5} parent=11 // pred_fallthru
          _
      $region12: #{autoencoder_forward.5} parent=5 // pred_fallthru
        _
      %p202 = scmp.lt.s32.totalorder %s15, 2
      // Predicated region
      $region33: #{autoencoder_forward.5} parent=5 // pred_check
        %p203 = pneg %p202
      $region34: #{autoencoder_forward.5} parent=5 // pred_check_branch
        %205 = sbr.rel (%p203) target = $region36
      $region35: #{autoencoder_forward.5} parent=5 // pred_region
        // Predicated region
        $region37: #{autoencoder_forward.5} parent=35 // pred_check
          %p206 = pneg %p35
        $region38: #{autoencoder_forward.5} parent=35 // pred_check_branch
          %208 = sbr.rel (%p206) target = $region40
        $region39: #{autoencoder_forward.5} parent=35 // pred_region
          %p209 = scmp.lt.s32.totalorder %s15, 1
          %s210 = scalar_select %p209, %s15, 1
          %s211 = smul.addr %s210, 8
          %s212 = scalar_lea.vmem %s0, %s211
        $region40: #{autoencoder_forward.5} parent=35 // pred_fallthru
          _
      $region36: #{autoencoder_forward.5} parent=5 // pred_fallthru
        _
      %p213 = scmp.le.s32.totalorder 1, %s15
      %p214 = scmp.lt.s32.totalorder %s15, 3
      %p215 = pnand %p213, %p214
      %p216 = pneg %p215
      // Predicated region
      $region41: #{autoencoder_forward.5} parent=5 // pred_check
        _
      $region42: #{autoencoder_forward.5} parent=5 // pred_check_branch
        %218 = sbr.rel (%p215) target = $region44
      $region43: #{autoencoder_forward.5} parent=5 // pred_region
        %s219 = ssub.s32 %s15, 1
        %p220 = scmp.lt.s32.totalorder %s20, 1
        %s221 = scalar_select %p220, %s20, 1
        %s222 = smul.addr %s221, 8
        %s223 = scalar_lea.vmem %s0, %s222
        %p224 = pneg %p41
        %p225 = pneg %p38
        %p226 = pneg %p62
        %p227 = pneg %p59
        %p228 = pneg %p83
        %p229 = pneg %p80
        %p230 = pneg %p104
        %p231 = pneg %p101
        %p232 = pneg %p125
        %p233 = pneg %p122
        %p234 = pneg %p146
        %p235 = pneg %p143
        %p236 = pneg %p172
        %p237 = pneg %p169
        %s238 = sand.u32 %s159, 1
        %s239 = scalar_lea.sflag [#allocation3], %s238
        %s240 = sand.u32 %s159, 1
        %s241 = smul.addr %s240, 8
        %s242 = scalar_lea.vmem [#allocation2], %s241
        %p243 = scmp.lt.s32.totalorder %s20, 1
        %s244 = scalar_select %p243, %s20, 1
        %s245 = smul.addr %s244, 8
        %s246 = scalar_lea.vmem %s0, %s245
        %v247 = vld [vmem:[%s246] sm:$0xff]
        %v248 = vld [vmem:[%s2] sm:$0xff]
        %v249 = vld [vmem:[%s2 + $0x8] sm:$0xff]
        %v250 = vld [vmem:[%s2 + $0x10] sm:$0xff]
        %v251 = vld [vmem:[%s2 + $0x18] sm:$0xff]
        %v252 = vld [vmem:[%s2 + $0x20] sm:$0xff]
        %v253 = vld [vmem:[%s2 + $0x28] sm:$0xff]
        %v254 = vld [vmem:[%s2 + $0x30] sm:$0xff]
        %v255 = vld [vmem:[%s2 + $0x38] sm:$0xff]
        %v256 = vld [vmem:[%s2 + $0x40] sm:$0xff]
        %v257 = vld [vmem:[%s2 + $0x48] sm:$0xff]
        %v258 = vld [vmem:[%s2 + $0x50] sm:$0xff]
        %v259 = vld [vmem:[%s2 + $0x58] sm:$0xff]
        %v260 = vld [vmem:[%s2 + $0x60] sm:$0xff]
        %v261 = vld [vmem:[%s2 + $0x68] sm:$0xff]
        %v262 = vld [vmem:[%s2 + $0x70] sm:$0xff]
        %v263 = vld [vmem:[%s2 + $0x78] sm:$0xff]
        %v264 = vld [vmem:[%s3] sm:$0x1]
        %v266 = vperm.slane %v264, 0
        %268 = vmatpush.msra.mxu0 %v263
        %269 = vmatpush.msra.mxu0 %v262
        %270 = vmatpush.msra.mxu0 %v261
        %271 = vmatpush.msra.mxu0 %v260
        %272 = vmatpush.msra.mxu0 %v259
        %273 = vmatpush.msra.mxu0 %v258
        %274 = vmatpush.msra.mxu0 %v257
        %275 = vmatpush.msra.mxu0 %v256
        %276 = vmatpush.msra.mxu0 %v255
        %277 = vmatpush.msra.mxu0 %v254
        %278 = vmatpush.msra.mxu0 %v253
        %279 = vmatpush.msra.mxu0 %v252
        %280 = vmatpush.msra.mxu0 %v251
        %281 = vmatpush.msra.mxu0 %v250
        %282 = vmatpush.msra.mxu0 %v249
        %283 = vmatpush.msra.mxu0 %v248
        %284 = vmatmul.f32.gmra.mxu0 %v247
        %v285 = vpop.f32.mrf.mxu0
        %v286 = vadd.f32 %v266, %v285
        %287 = vdwg.mxu0
        %v288 = vld [vmem:[%s1] sm:$0x1]
        %v289 = vperm.slane %v288, 0
        %v290 = vmul.f32 %v286, %v289
        %v291 = vld [vmem:[%s1 + $0x1] sm:$0x1]
        %v292 = vperm.slane %v291, 0
        %v293 = vadd.f32 %v290, %v292
        %v294 = vmax.f32 %v293, 0.0
        %v295 = vld [vmem:[%s4] sm:$0xff]
        %v296 = vld [vmem:[%s4 + $0x8] sm:$0xff]
        %v297 = vld [vmem:[%s4 + $0x10] sm:$0xff]
        %v298 = vld [vmem:[%s4 + $0x18] sm:$0xff]
        %v299 = vld [vmem:[%s4 + $0x20] sm:$0xff]
        %v300 = vld [vmem:[%s4 + $0x28] sm:$0xff]
        %v301 = vld [vmem:[%s4 + $0x30] sm:$0xff]
        %v302 = vld [vmem:[%s4 + $0x38] sm:$0xff]
        %v303 = vld [vmem:[%s4 + $0x40] sm:$0xff]
        %v304 = vld [vmem:[%s4 + $0x48] sm:$0xff]
        %v305 = vld [vmem:[%s4 + $0x50] sm:$0xff]
        %v306 = vld [vmem:[%s4 + $0x58] sm:$0xff]
        %v307 = vld [vmem:[%s4 + $0x60] sm:$0xff]
        %v308 = vld [vmem:[%s4 + $0x68] sm:$0xff]
        %v309 = vld [vmem:[%s4 + $0x70] sm:$0xff]
        %v310 = vld [vmem:[%s4 + $0x78] sm:$0xff]
        %v311 = vld [vmem:[%s5] sm:$0x1]
        %v313 = vperm.slane %v311, 0
        %315 = vmatpush.msra.mxu0 %v310
        %316 = vmatpush.msra.mxu0 %v309
        %317 = vmatpush.msra.mxu0 %v308
        %318 = vmatpush.msra.mxu0 %v307
        %319 = vmatpush.msra.mxu0 %v306
        %320 = vmatpush.msra.mxu0 %v305
        %321 = vmatpush.msra.mxu0 %v304
        %322 = vmatpush.msra.mxu0 %v303
        %323 = vmatpush.msra.mxu0 %v302
        %324 = vmatpush.msra.mxu0 %v301
        %325 = vmatpush.msra.mxu0 %v300
        %326 = vmatpush.msra.mxu0 %v299
        %327 = vmatpush.msra.mxu0 %v298
        %328 = vmatpush.msra.mxu0 %v297
        %329 = vmatpush.msra.mxu0 %v296
        %330 = vmatpush.msra.mxu0 %v295
        %331 = vmatmul.f32.gmra.mxu0 %v294
        %v332 = vpop.f32.mrf.mxu0
        %v333 = vadd.f32 %v313, %v332
        %334 = vdwg.mxu0
        %335 = vst [vmem:[%s242] sm:$0xff] %v333
        %s336 = sand.u32 %s159, 1
        %s337 = scalar_lea.sflag [#allocation3], %s336
        %s338 = sand.u32 %s159, 1
        %s339 = smul.addr %s338, 8
        %s340 = scalar_lea.vmem [#allocation2], %s339
        // Predicated region
        $region45: #{autoencoder_forward.5} parent=43 // pred_check
          %p341 = pneg %p169
        $region46: #{autoencoder_forward.5} parent=43 // pred_check_branch
          %343 = sbr.rel (%p341) target = $region48
        $region47: #{autoencoder_forward.5} parent=43 // pred_region
          %345 = vsyncadd %s337, 0
          %s346 = smul.addr %s20, 8
          %s347 = scalar_lea.hbm %s6, %s346
          %s349 = sshll.u32 %s340, 4
          %s350 = int_to_ptr.vmem [resolvable:$true] %s349
          %s351 = sshll.u32 %s347, 4
          %s352 = int_to_ptr.hbm [resolvable:$true] %s351
          %354 = dma.vmem_to_hbm [thread:$0]  %s350, 128, %s352, %s337
        $region48: #{autoencoder_forward.5} parent=43 // pred_fallthru
          _
      $region44: #{autoencoder_forward.5} parent=5 // pred_fallthru
        _
      %p355 = scmp.le.s32.totalorder 2, %s15
      // Predicated region
      $region49: #{autoencoder_forward.5} parent=5 // pred_check
        %p356 = pneg %p355
      $region50: #{autoencoder_forward.5} parent=5 // pred_check_branch
        %358 = sbr.rel (%p356) target = $region52
      $region51: #{autoencoder_forward.5} parent=5 // pred_region
        %s359 = ssub.s32 %s15, 2
        // Predicated region
        $region53: #{autoencoder_forward.5} parent=51 // pred_check
          %p360 = pneg %p175
        $region54: #{autoencoder_forward.5} parent=51 // pred_check_branch
          %362 = sbr.rel (%p360) target = $region56
        $region55: #{autoencoder_forward.5} parent=51 // pred_region
          %s363 = sand.u32 %s160, 1
          %s364 = scalar_lea.sflag [#allocation3], %s363
          %s365 = sand.u32 %s160, 1
          %s366 = smul.addr %s365, 8
          %s367 = scalar_lea.vmem [#allocation2], %s366
          %369 = dma.done %s364, 128
        $region56: #{autoencoder_forward.5} parent=51 // pred_fallthru
          _
      $region52: #{autoencoder_forward.5} parent=5 // pred_fallthru
        _
    $region6: #{autoencoder_forward.5} parent=1 // loop_footer
      %s19 = sadd.s32 1, %s15
    $region7: #{autoencoder_forward.5} parent=1 // loop_footer_branch
      %14 = sbr.rel target = $region3
    $region8: #{autoencoder_forward.5} parent=1 // loop_exit
      _
    %370 = vsyncpa [#allocation3], 1
    %s371 = scalar_lea.sflag [#allocation3], 1
    %372 = vsyncpa %s371, 1

</llo_original>
